<compile_context>
chip_gen: v5e
topology: v5e:2x2
jax: 0.10.0
libtpu: 0.0.40
codegen_flags: <defaults>
</compile_context>

<pallas_src>
import math

import numpy as np
import jax
import jax.numpy as jnp
from jax.experimental import pallas as pl
from jax.experimental.pallas import tpu as pltpu

NUM_NEURONS = 128   # numNeurons
EMBED_DIM   = 128   # embedDimension
HIDDEN      = 512   # hidden width hard-coded in memoryInfluence2
LN_EPS      = 1e-5  # torch.nn.LayerNorm default eps


# ---------------------------------------------------------------------------
# in-kernel math helpers (elementwise / lane reductions that Mosaic supports)
# ---------------------------------------------------------------------------
def _fast_recip(x):
    # EUP approximate reciprocal + one Newton-Raphson step => ~full f32
    # accuracy without a serializing vector divide.
    r = pl.reciprocal(x, approx=True)
    return r * (2.0 - x * r)


def _erf(x):
    # Abramowitz & Stegun 7.1.26 rational approximation (|err| < 1.5e-7),
    # built only from exp/abs/mul/add/recip so it lowers cleanly on TPU.
    a1, a2, a3, a4, a5 = 0.254829592, -0.284496736, 1.421413741, -1.453152027, 1.061405429
    p = 0.3275911
    sign = jnp.where(x >= 0.0, 1.0, -1.0)
    ax = jnp.abs(x)
    t = _fast_recip(1.0 + p * ax)
    poly = ((((a5 * t + a4) * t + a3) * t + a2) * t + a1) * t
    return sign * (1.0 - poly * jnp.exp(-ax * ax))


def _gelu_exact(x):
    # torch.nn.GELU() default is the exact (erf-based) GELU.
    return 0.5 * x * (1.0 + _erf(x * (1.0 / math.sqrt(2.0))))


def _layernorm(x, gamma, beta):
    mean = jnp.mean(x, axis=-1, keepdims=True)
    var = jnp.mean((x - mean) ** 2, axis=-1, keepdims=True)
    return (x - mean) * jax.lax.rsqrt(var + LN_EPS) * gamma + beta


# ---------------------------------------------------------------------------
# the kernel: one grid step == one forward() (+ implicit updateMemoryBuffers())
# ---------------------------------------------------------------------------
def memory_kernel(dec_ref,                      # SMEM (2,)  [sigmoid(shortDecay), sigmoid(longDecay)]
                  x_ref,                        # (1, 1, N)  this step's raw activations
                  stm0_ref, ltm0_ref,           # (1, N)     initial memory buffers
                  wirg2_ref, birg2_ref,         # (N, 4N), (1, 4N)   W_ir@W_g2 fused
                  wirm1_ref, wmpm1_ref, bfold_ref,   # (N, H), (N, H), (1, H)
                  ln1g_ref, ln1b_ref,           # (1, H)
                  wm2_ref, bm2_ref,             # (H, N), (1, N)
                  ln2g_ref, ln2b_ref,           # (1, N)
                  final_ref,                    # (1, 1, N)  per-step FINALmemory
                  newshort_ref, newlong_ref):   # (1, N)     final memory state (carried)
    N = NUM_NEURONS
    t = pl.program_id(0)

    # EMA state is carried across grid steps inside the constant-index,
    # VMEM-resident output buffers (no scratch, no per-step HBM traffic).
    @pl.when(t == 0)
    def _():
        newshort_ref[...] = stm0_ref[...]
        newlong_ref[...] = ltm0_ref[...]

    x = x_ref[0]                       # (1, N)
    prev_short = newshort_ref[...]
    prev_long = newlong_ref[...]

    sd = dec_ref[0]                    # sigmoid(shortTermDecay), scalar from SMEM
    ld = dec_ref[1]                    # sigmoid(longTermDecay)
    # x + d*(prev - x) == d*prev + (1-d)*x, keeps the scalar on vector muls only
    new_short = x + sd * (prev_short - x)
    new_long = x + ld * (prev_long - x)

    # gateLayer2(inputReducer(x)) with the two Linears folded into one matmul.
    gate_logits = jnp.dot(x, wirg2_ref[...],
                          preferred_element_type=jnp.float32) + birg2_ref[...]
    # .view(4, N) realized as four contiguous 128-lane slices; clamp(-30, 30)
    # then softmax over the 4 gates (elementwise over the N lanes).
    g = [jnp.clip(gate_logits[:, k * N:(k + 1) * N], -30.0, 30.0) for k in range(4)]
    m = jnp.maximum(jnp.maximum(g[0], g[1]), jnp.maximum(g[2], g[3]))
    e = [jnp.exp(gk - m) for gk in g]
    inv = _fast_recip(e[0] + e[1] + e[2] + e[3])
    short_gate = e[0] * inv
    long_gate = e[1] * inv
    act_gate = e[2] * inv
    mem_gate = e[3] * inv

    first_gated = short_gate * new_short + long_gate * new_long + act_gate * x

    # memoryInfluence2 first Linear with inputReducer/memoryProjector folded:
    #   mixed @ W_m1 + b_m1 == x @ W_irm1 + first_gated @ W_mpm1 + b_fold
    # (x @ W_irm1 issues right after the x load, in parallel with the gate chain)
    x_m1 = jnp.dot(x, wirm1_ref[...], preferred_element_type=jnp.float32)
    p_m1 = jnp.dot(first_gated, wmpm1_ref[...], preferred_element_type=jnp.float32)
    h = x_m1 + p_m1 + bfold_ref[...]
    h = _gelu_exact(h)
    h = _layernorm(h, ln1g_ref[...], ln1b_ref[...])
    h = jnp.dot(h, wm2_ref[...], preferred_element_type=jnp.float32) + bm2_ref[...]
    memory_gate = _layernorm(h, ln2g_ref[...], ln2b_ref[...])

    # reuse first_gated instead of recomputing the 3-term gated sum
    final_ref[0] = first_gated + mem_gate * memory_gate

    newshort_ref[...] = new_short
    newlong_ref[...] = new_long


# ---------------------------------------------------------------------------
# wrappers
# ---------------------------------------------------------------------------
def prepare_inference_params(p):
    """One-time (per weight update) prep outside the hot path: weight fusion +
    sigmoid of the decay scalars.  Runs as plain XLA."""
    w_irg2 = p["w_ir"] @ p["w_g2"]                       # (N, 4N)
    b_irg2 = p["b_ir"] @ p["w_g2"] + p["b_g2"]           # (1, 4N)
    w_irm1 = p["w_ir"] @ p["w_m1"]                       # (N, H)
    w_mpm1 = p["w_mp"] @ p["w_m1"]                       # (N, H)
    b_fold = (p["b_ir"] + p["b_mp"]) @ p["w_m1"] + p["b_m1"]   # (1, H)
    decays = jnp.concatenate([jax.nn.sigmoid(p["short_decay"]).reshape(-1),
                              jax.nn.sigmoid(p["long_decay"]).reshape(-1)])  # (2,)
    return dict(decays=decays,
                w_irg2=w_irg2, b_irg2=b_irg2,
                w_irm1=w_irm1, w_mpm1=w_mpm1, b_fold=b_fold,
                ln1_g=p["ln1_g"], ln1_b=p["ln1_b"],
                w_m2=p["w_m2"], b_m2=p["b_m2"],
                ln2_g=p["ln2_g"], ln2_b=p["ln2_b"])


@jax.jit
def memory_forward(xs, stm, ltm, prep):
    """xs: (T, 1, N) activations for T consecutive steps; stm/ltm: (1, N) initial
    memory buffers.  Returns (FINALmemory per step (T,1,N), new shortTermMemory
    (1,N), new longTermMemory (1,N)).  T=1 == one nn.Module.forward()."""
    T = xs.shape[0]
    N, H = NUM_NEURONS, HIDDEN

    def resident(shape):
        zeros = (0,) * len(shape)
        return pl.BlockSpec(shape, lambda t, _z=zeros: _z)

    in_specs = [
        pl.BlockSpec(memory_space=pltpu.MemorySpace.SMEM),   # decays (2,)
        pl.BlockSpec((1, 1, N), lambda t: (t, 0, 0)),        # xs, one step per grid iter
        resident((1, N)),                                    # stm0
        resident((1, N)),                                    # ltm0
        resident((N, 4 * N)), resident((1, 4 * N)),          # w_irg2, b_irg2
        resident((N, H)), resident((N, H)), resident((1, H)),  # w_irm1, w_mpm1, b_fold
        resident((1, H)), resident((1, H)),                  # ln1 gamma/beta
        resident((H, N)), resident((1, N)),                  # w_m2, b_m2
        resident((1, N)), resident((1, N)),                  # ln2 gamma/beta
    ]
    out_specs = (
        pl.BlockSpec((1, 1, N), lambda t: (t, 0, 0)),        # FINALmemory per step
        resident((1, N)),                                    # new shortTermMemory
        resident((1, N)),                                    # new longTermMemory
    )
    out_shape = (
        jax.ShapeDtypeStruct((T, 1, N), jnp.float32),
        jax.ShapeDtypeStruct((1, N), jnp.float32),
        jax.ShapeDtypeStruct((1, N), jnp.float32),
    )

    return pl.pallas_call(
        memory_kernel,
        grid=(T,),
        in_specs=in_specs,
        out_specs=out_specs,
        out_shape=out_shape,
        # write the updated memory state in place over the incoming buffers
        input_output_aliases={2: 1, 3: 2},
        compiler_params=pltpu.CompilerParams(
            dimension_semantics=("arbitrary",)),   # recurrent carry -> sequential
    )(prep["decays"], xs, stm, ltm,
      prep["w_irg2"], prep["b_irg2"],
      prep["w_irm1"], prep["w_mpm1"], prep["b_fold"],
      prep["ln1_g"], prep["ln1_b"],
      prep["w_m2"], prep["b_m2"],
      prep["ln2_g"], prep["ln2_b"])


# ---------------------------------------------------------------------------
# deterministic parameter init (same shapes / init style as torch.nn.Linear)
# ---------------------------------------------------------------------------
def init_params(key):
    ks = jax.random.split(key, 5)

    def linear(k, fan_in, fan_out):
        kw, kb = jax.random.split(k)
        bound = 1.0 / math.sqrt(fan_in)
        w = jax.random.uniform(kw, (fan_in, fan_out), jnp.float32, -bound, bound)
        b = jax.random.uniform(kb, (1, fan_out), jnp.float32, -bound, bound)
        return w, b

    w_ir, b_ir = linear(ks[0], NUM_NEURONS, EMBED_DIM)        # inputReducer
    w_g2, b_g2 = linear(ks[1], EMBED_DIM, 4 * NUM_NEURONS)    # gateLayer2
    w_mp, b_mp = linear(ks[2], NUM_NEURONS, EMBED_DIM)        # memoryProjector
    w_m1, b_m1 = linear(ks[3], EMBED_DIM, HIDDEN)             # memoryInfluence2[0]
    w_m2, b_m2 = linear(ks[4], HIDDEN, NUM_NEURONS)           # memoryInfluence2[3]

    return dict(
        short_decay=jnp.full((1, 1), 0.70, jnp.float32),
        long_decay=jnp.full((1, 1), 0.95, jnp.float32),
        w_ir=w_ir, b_ir=b_ir,
        w_g2=w_g2, b_g2=b_g2,
        w_mp=w_mp, b_mp=b_mp,
        w_m1=w_m1, b_m1=b_m1,
        ln1_g=jnp.ones((1, HIDDEN), jnp.float32),
        ln1_b=jnp.zeros((1, HIDDEN), jnp.float32),
        w_m2=w_m2, b_m2=b_m2,
        ln2_g=jnp.ones((1, NUM_NEURONS), jnp.float32),
        ln2_b=jnp.zeros((1, NUM_NEURONS), jnp.float32),
    )


# ---------------------------------------------------------------------------
# pure-JAX reference (mirrors the PyTorch forward exactly: unfused weights,
# exact-erf GELU, true divides)
# ---------------------------------------------------------------------------
def reference_forward(x, stm, ltm, p):
    sd = jax.nn.sigmoid(p["short_decay"])
    ld = jax.nn.sigmoid(p["long_decay"])
    new_short = sd * stm + (1.0 - sd) * x
    new_long = ld * ltm + (1.0 - ld) * x

    reduced = x @ p["w_ir"] + p["b_ir"]
    gate_logits = (reduced @ p["w_g2"] + p["b_g2"]).reshape(4, NUM_NEURONS)
    gate_logits = jnp.clip(gate_logits, -30.0, 30.0)
    gate_w = jax.nn.softmax(gate_logits, axis=0)
    sg, lg, ag, mg = (gate_w[0][None, :], gate_w[1][None, :],
                      gate_w[2][None, :], gate_w[3][None, :])

    first_gated = sg * new_short + lg * new_long + ag * x
    projected = first_gated @ p["w_mp"] + p["b_mp"]
    mixed = reduced + projected

    h = mixed @ p["w_m1"] + p["b_m1"]
    h = 0.5 * h * (1.0 + jax.scipy.special.erf(h / math.sqrt(2.0)))   # exact GELU
    h = _layernorm(h, p["ln1_g"], p["ln1_b"])
    h = h @ p["w_m2"] + p["b_m2"]
    memory_gate = _layernorm(h, p["ln2_g"], p["ln2_b"])

    final = sg * new_short + lg * new_long + ag * x + mg * memory_gate
    return final, new_short, new_long


if __name__ == "__main__":
    key = jax.random.PRNGKey(0)
    kx, ks, kl, kp = jax.random.split(key, 4)

    T = 8  # fused recurrent steps: one grid iter == forward() + updateMemoryBuffers()
    xs = jax.random.normal(kx, (T, 1, NUM_NEURONS), jnp.float32)
    stm = 0.1 * jax.random.normal(ks, (1, NUM_NEURONS), jnp.float32)  # shortTermMemory
    ltm = 0.1 * jax.random.normal(kl, (1, NUM_NEURONS), jnp.float32)  # longTermMemory
    params = init_params(kp)
    prep = prepare_inference_params(params)

    finals, new_s, new_l = memory_forward(xs, stm, ltm, prep)
    jax.block_until_ready(finals)

    # reference: T sequential torch-style forward() calls with buffer commits
    ref_finals = []
    r_stm, r_ltm = stm, ltm
    for t in range(T):
        f, r_stm, r_ltm = reference_forward(xs[t], r_stm, r_ltm, params)
        ref_finals.append(f)
    ref_finals = jnp.stack(ref_finals)

    assert np.allclose(np.asarray(finals), np.asarray(ref_finals), atol=2e-4, rtol=2e-4)
    assert np.allclose(np.asarray(new_s), np.asarray(r_stm), atol=1e-5, rtol=1e-5)
    assert np.allclose(np.asarray(new_l), np.asarray(r_ltm), atol=1e-5, rtol=1e-5)

    # single-step (T=1) check == exactly one nn.Module.forward()
    f1, s1, l1 = memory_forward(xs[:1], stm, ltm, prep)
    jax.block_until_ready(f1)
    rf1, rs1, rl1 = reference_forward(xs[0], stm, ltm, params)
    assert np.allclose(np.asarray(f1[0]), np.asarray(rf1), atol=2e-4, rtol=2e-4)
    assert np.allclose(np.asarray(s1), np.asarray(rs1), atol=1e-5, rtol=1e-5)
    assert np.allclose(np.asarray(l1), np.asarray(rl1), atol=1e-5, rtol=1e-5)

    print("KERNEL_OK")
</pallas_src>

<mosaic_0001>
module attributes {stable_mosaic.version = 11 : i64} {
  func.func @memory_kernel(%arg0: i32, %arg1: memref<2xf32, #tpu.memory_space<smem>>, %arg2: memref<1x1x128xf32, #tpu.memory_space<vmem>>, %arg3: memref<1x128xf32, #tpu.memory_space<vmem>>, %arg4: memref<1x128xf32, #tpu.memory_space<vmem>>, %arg5: memref<128x512xf32, #tpu.memory_space<vmem>>, %arg6: memref<1x512xf32, #tpu.memory_space<vmem>>, %arg7: memref<128x512xf32, #tpu.memory_space<vmem>>, %arg8: memref<128x512xf32, #tpu.memory_space<vmem>>, %arg9: memref<1x512xf32, #tpu.memory_space<vmem>>, %arg10: memref<1x512xf32, #tpu.memory_space<vmem>>, %arg11: memref<1x512xf32, #tpu.memory_space<vmem>>, %arg12: memref<512x128xf32, #tpu.memory_space<vmem>>, %arg13: memref<1x128xf32, #tpu.memory_space<vmem>>, %arg14: memref<1x128xf32, #tpu.memory_space<vmem>>, %arg15: memref<1x128xf32, #tpu.memory_space<vmem>>, %arg16: memref<1x1x128xf32, #tpu.memory_space<vmem>>, %arg17: memref<1x128xf32, #tpu.memory_space<vmem>>, %arg18: memref<1x128xf32, #tpu.memory_space<vmem>>) attributes {dimension_semantics = [#tpu.dimension_semantics<arbitrary>], iteration_bounds = array<i64: 8>, scalar_prefetch = 0 : i64, scratch_operands = 0 : i64, tpu.core_type = #tpu.core_type<tc>, window_params = [{transform_indices = @transform_0, window_bounds = array<i64: 2>}, {transform_indices = @transform_1, window_bounds = array<i64: 1, 1, 128>}, {pipeline_mode = #tpu.pipeline_mode<synchronous>, transform_indices = @transform_2, window_bounds = array<i64: 1, 128>}, {pipeline_mode = #tpu.pipeline_mode<synchronous>, transform_indices = @transform_3, window_bounds = array<i64: 1, 128>}, {pipeline_mode = #tpu.pipeline_mode<synchronous>, transform_indices = @transform_4, window_bounds = array<i64: 128, 512>}, {pipeline_mode = #tpu.pipeline_mode<synchronous>, transform_indices = @transform_5, window_bounds = array<i64: 1, 512>}, {pipeline_mode = #tpu.pipeline_mode<synchronous>, transform_indices = @transform_6, window_bounds = array<i64: 128, 512>}, {pipeline_mode = #tpu.pipeline_mode<synchronous>, transform_indices = @transform_7, window_bounds = array<i64: 128, 512>}, {pipeline_mode = #tpu.pipeline_mode<synchronous>, transform_indices = @transform_8, window_bounds = array<i64: 1, 512>}, {pipeline_mode = #tpu.pipeline_mode<synchronous>, transform_indices = @transform_9, window_bounds = array<i64: 1, 512>}, {pipeline_mode = #tpu.pipeline_mode<synchronous>, transform_indices = @transform_10, window_bounds = array<i64: 1, 512>}, {pipeline_mode = #tpu.pipeline_mode<synchronous>, transform_indices = @transform_11, window_bounds = array<i64: 512, 128>}, {pipeline_mode = #tpu.pipeline_mode<synchronous>, transform_indices = @transform_12, window_bounds = array<i64: 1, 128>}, {pipeline_mode = #tpu.pipeline_mode<synchronous>, transform_indices = @transform_13, window_bounds = array<i64: 1, 128>}, {pipeline_mode = #tpu.pipeline_mode<synchronous>, transform_indices = @transform_14, window_bounds = array<i64: 1, 128>}, {transform_indices = @transform_15, window_bounds = array<i64: 1, 1, 128>}, {pipeline_mode = #tpu.pipeline_mode<synchronous>, transform_indices = @transform_16, window_bounds = array<i64: 1, 128>}, {pipeline_mode = #tpu.pipeline_mode<synchronous>, transform_indices = @transform_17, window_bounds = array<i64: 1, 128>}]} {
    %c0_i32 = arith.constant 0 : i32
    %0 = arith.cmpi eq, %arg0, %c0_i32 : i32
    %1 = arith.extui %0 : i1 to i32
    %c0_i32_0 = arith.constant 0 : i32
    %2 = arith.cmpi ne, %1, %c0_i32_0 : i32
    scf.if %2 {
      %c0_75 = arith.constant 0 : index
      %c0_76 = arith.constant 0 : index
      %175 = vector.load %arg3[%c0_75, %c0_76] : memref<1x128xf32, #tpu.memory_space<vmem>>, vector<1x128xf32>
      %c0_77 = arith.constant 0 : index
      %c0_78 = arith.constant 0 : index
      %176 = vector.load %arg17[%c0_77, %c0_78] : memref<1x128xf32, #tpu.memory_space<vmem>>, vector<1x128xf32>
      tpu.vector_store %arg17[%c0_77, %c0_78], %175 {strides = array<i32>} : memref<1x128xf32, #tpu.memory_space<vmem>>, vector<1x128xf32>,
      %c0_79 = arith.constant 0 : index
      %c0_80 = arith.constant 0 : index
      %177 = vector.load %arg4[%c0_79, %c0_80] : memref<1x128xf32, #tpu.memory_space<vmem>>, vector<1x128xf32>
      %c0_81 = arith.constant 0 : index
      %c0_82 = arith.constant 0 : index
      %178 = vector.load %arg18[%c0_81, %c0_82] : memref<1x128xf32, #tpu.memory_space<vmem>>, vector<1x128xf32>
      tpu.vector_store %arg18[%c0_81, %c0_82], %177 {strides = array<i32>} : memref<1x128xf32, #tpu.memory_space<vmem>>, vector<1x128xf32>,
    } else {
    }
    %c0 = arith.constant 0 : index
    %c0_1 = arith.constant 0 : index
    %c0_2 = arith.constant 0 : index
    %3 = vector.load %arg2[%c0, %c0_1, %c0_2] : memref<1x1x128xf32, #tpu.memory_space<vmem>>, vector<1x1x128xf32>
    %4 = vector.shape_cast %3 : vector<1x1x128xf32> to vector<1x128xf32>
    %c0_3 = arith.constant 0 : index
    %c0_4 = arith.constant 0 : index
    %5 = vector.load %arg17[%c0_3, %c0_4] : memref<1x128xf32, #tpu.memory_space<vmem>>, vector<1x128xf32>
    %c0_5 = arith.constant 0 : index
    %c0_6 = arith.constant 0 : index
    %6 = vector.load %arg18[%c0_5, %c0_6] : memref<1x128xf32, #tpu.memory_space<vmem>>, vector<1x128xf32>
    %c0_7 = arith.constant 0 : index
    %7 = memref.load %arg1[%c0_7] : memref<2xf32, #tpu.memory_space<smem>>
    %c1 = arith.constant 1 : index
    %8 = memref.load %arg1[%c1] : memref<2xf32, #tpu.memory_space<smem>>
    %9 = arith.subf %5, %4 : vector<1x128xf32>
    %10 = vector.broadcast %7 : f32 to vector<1x128xf32>
    %11 = arith.mulf %10, %9 : vector<1x128xf32>
    %12 = arith.addf %4, %11 : vector<1x128xf32>
    %13 = arith.subf %6, %4 : vector<1x128xf32>
    %14 = vector.broadcast %8 : f32 to vector<1x128xf32>
    %15 = arith.mulf %14, %13 : vector<1x128xf32>
    %16 = arith.addf %4, %15 : vector<1x128xf32>
    %c0_8 = arith.constant 0 : index
    %c0_9 = arith.constant 0 : index
    %17 = vector.load %arg5[%c0_8, %c0_9] : memref<128x512xf32, #tpu.memory_space<vmem>>, vector<128x512xf32>
    %cst = arith.constant dense<0.000000e+00> : vector<1x512xf32>
    %18 = tpu.matmul %4, %17, %cst {dimension_numbers = #tpu.dot_dimension_numbers<[1], [0], [0], [1], [0, 0, 1, 1], [], []>} : vector<1x128xf32>, vector<128x512xf32>, vector<1x512xf32> -> vector<1x512xf32>
    %c0_10 = arith.constant 0 : index
    %c0_11 = arith.constant 0 : index
    %19 = vector.load %arg6[%c0_10, %c0_11] : memref<1x512xf32, #tpu.memory_space<vmem>>, vector<1x512xf32>
    %20 = arith.addf %18, %19 : vector<1x512xf32>
    %21 = vector.extract_strided_slice %20 {offsets = [0, 0], sizes = [1, 128], strides = [1, 1]} : vector<1x512xf32> to vector<1x128xf32>
    %cst_12 = arith.constant -3.000000e+01 : f32
    %cst_13 = arith.constant 3.000000e+01 : f32
    %22 = vector.broadcast %cst_12 : f32 to vector<1x128xf32>
    %23 = arith.maximumf %22, %21 : vector<1x128xf32>
    %24 = vector.broadcast %cst_13 : f32 to vector<1x128xf32>
    %25 = arith.minimumf %24, %23 : vector<1x128xf32>
    %26 = vector.extract_strided_slice %20 {offsets = [0, 128], sizes = [1, 128], strides = [1, 1]} : vector<1x512xf32> to vector<1x128xf32>
    %cst_14 = arith.constant -3.000000e+01 : f32
    %cst_15 = arith.constant 3.000000e+01 : f32
    %27 = vector.broadcast %cst_14 : f32 to vector<1x128xf32>
    %28 = arith.maximumf %27, %26 : vector<1x128xf32>
    %29 = vector.broadcast %cst_15 : f32 to vector<1x128xf32>
    %30 = arith.minimumf %29, %28 : vector<1x128xf32>
    %31 = vector.extract_strided_slice %20 {offsets = [0, 256], sizes = [1, 128], strides = [1, 1]} : vector<1x512xf32> to vector<1x128xf32>
    %cst_16 = arith.constant -3.000000e+01 : f32
    %cst_17 = arith.constant 3.000000e+01 : f32
    %32 = vector.broadcast %cst_16 : f32 to vector<1x128xf32>
    %33 = arith.maximumf %32, %31 : vector<1x128xf32>
    %34 = vector.broadcast %cst_17 : f32 to vector<1x128xf32>
    %35 = arith.minimumf %34, %33 : vector<1x128xf32>
    %36 = vector.extract_strided_slice %20 {offsets = [0, 384], sizes = [1, 128], strides = [1, 1]} : vector<1x512xf32> to vector<1x128xf32>
    %cst_18 = arith.constant -3.000000e+01 : f32
    %cst_19 = arith.constant 3.000000e+01 : f32
    %37 = vector.broadcast %cst_18 : f32 to vector<1x128xf32>
    %38 = arith.maximumf %37, %36 : vector<1x128xf32>
    %39 = vector.broadcast %cst_19 : f32 to vector<1x128xf32>
    %40 = arith.minimumf %39, %38 : vector<1x128xf32>
    %41 = arith.maximumf %25, %30 : vector<1x128xf32>
    %42 = arith.maximumf %35, %40 : vector<1x128xf32>
    %43 = arith.maximumf %41, %42 : vector<1x128xf32>
    %44 = arith.subf %25, %43 : vector<1x128xf32>
    %45 = math.exp %44 : vector<1x128xf32>
    %46 = arith.subf %30, %43 : vector<1x128xf32>
    %47 = math.exp %46 : vector<1x128xf32>
    %48 = arith.subf %35, %43 : vector<1x128xf32>
    %49 = math.exp %48 : vector<1x128xf32>
    %50 = arith.subf %40, %43 : vector<1x128xf32>
    %51 = math.exp %50 : vector<1x128xf32>
    %52 = arith.addf %45, %47 : vector<1x128xf32>
    %53 = arith.addf %52, %49 : vector<1x128xf32>
    %54 = arith.addf %53, %51 : vector<1x128xf32>
    %55 = tpu.reciprocal %54 {approx = true} : vector<1x128xf32> -> vector<1x128xf32>
    %56 = arith.mulf %54, %55 : vector<1x128xf32>
    %cst_20 = arith.constant 2.000000e+00 : f32
    %57 = vector.broadcast %cst_20 : f32 to vector<1x128xf32>
    %58 = arith.subf %57, %56 : vector<1x128xf32>
    %59 = arith.mulf %55, %58 : vector<1x128xf32>
    %60 = arith.mulf %45, %59 : vector<1x128xf32>
    %61 = arith.mulf %47, %59 : vector<1x128xf32>
    %62 = arith.mulf %49, %59 : vector<1x128xf32>
    %63 = arith.mulf %51, %59 : vector<1x128xf32>
    %64 = arith.mulf %60, %12 : vector<1x128xf32>
    %65 = arith.mulf %61, %16 : vector<1x128xf32>
    %66 = arith.addf %64, %65 : vector<1x128xf32>
    %67 = arith.mulf %62, %4 : vector<1x128xf32>
    %68 = arith.addf %66, %67 : vector<1x128xf32>
    %c0_21 = arith.constant 0 : index
    %c0_22 = arith.constant 0 : index
    %69 = vector.load %arg7[%c0_21, %c0_22] : memref<128x512xf32, #tpu.memory_space<vmem>>, vector<128x512xf32>
    %cst_23 = arith.constant dense<0.000000e+00> : vector<1x512xf32>
    %70 = tpu.matmul %4, %69, %cst_23 {dimension_numbers = #tpu.dot_dimension_numbers<[1], [0], [0], [1], [0, 0, 1, 1], [], []>} : vector<1x128xf32>, vector<128x512xf32>, vector<1x512xf32> -> vector<1x512xf32>
    %c0_24 = arith.constant 0 : index
    %c0_25 = arith.constant 0 : index
    %71 = vector.load %arg8[%c0_24, %c0_25] : memref<128x512xf32, #tpu.memory_space<vmem>>, vector<128x512xf32>
    %cst_26 = arith.constant dense<0.000000e+00> : vector<1x512xf32>
    %72 = tpu.matmul %68, %71, %cst_26 {dimension_numbers = #tpu.dot_dimension_numbers<[1], [0], [0], [1], [0, 0, 1, 1], [], []>} : vector<1x128xf32>, vector<128x512xf32>, vector<1x512xf32> -> vector<1x512xf32>
    %73 = arith.addf %70, %72 : vector<1x512xf32>
    %c0_27 = arith.constant 0 : index
    %c0_28 = arith.constant 0 : index
    %74 = vector.load %arg9[%c0_27, %c0_28] : memref<1x512xf32, #tpu.memory_space<vmem>>, vector<1x512xf32>
    %75 = arith.addf %73, %74 : vector<1x512xf32>
    %cst_29 = arith.constant 5.000000e-01 : f32
    %76 = vector.broadcast %cst_29 : f32 to vector<1x512xf32>
    %77 = arith.mulf %76, %75 : vector<1x512xf32>
    %cst_30 = arith.constant 0.707106769 : f32
    %78 = vector.broadcast %cst_30 : f32 to vector<1x512xf32>
    %79 = arith.mulf %75, %78 : vector<1x512xf32>
    %cst_31 = arith.constant 0.000000e+00 : f32
    %80 = vector.broadcast %cst_31 : f32 to vector<1x512xf32>
    %81 = arith.cmpf oge, %79, %80 : vector<1x512xf32>
    %cst_32 = arith.constant 1.000000e+00 : f32
    %cst_33 = arith.constant -1.000000e+00 : f32
    %82 = vector.broadcast %cst_32 : f32 to vector<1x512xf32>
    %83 = vector.broadcast %cst_33 : f32 to vector<1x512xf32>
    %84 = arith.select %81, %82, %83 : vector<1x512xi1>, vector<1x512xf32>
    %85 = math.absf %79 : vector<1x512xf32>
    %cst_34 = arith.constant 0.327591091 : f32
    %86 = vector.broadcast %cst_34 : f32 to vector<1x512xf32>
    %87 = arith.mulf %86, %85 : vector<1x512xf32>
    %cst_35 = arith.constant 1.000000e+00 : f32
    %88 = vector.broadcast %cst_35 : f32 to vector<1x512xf32>
    %89 = arith.addf %88, %87 : vector<1x512xf32>
    %90 = tpu.reciprocal %89 {approx = true} : vector<1x512xf32> -> vector<1x512xf32>
    %91 = arith.mulf %89, %90 : vector<1x512xf32>
    %cst_36 = arith.constant 2.000000e+00 : f32
    %92 = vector.broadcast %cst_36 : f32 to vector<1x512xf32>
    %93 = arith.subf %92, %91 : vector<1x512xf32>
    %94 = arith.mulf %90, %93 : vector<1x512xf32>
    %cst_37 = arith.constant 1.06140542 : f32
    %95 = vector.broadcast %cst_37 : f32 to vector<1x512xf32>
    %96 = arith.mulf %95, %94 : vector<1x512xf32>
    %cst_38 = arith.constant -1.45315206 : f32
    %97 = vector.broadcast %cst_38 : f32 to vector<1x512xf32>
    %98 = arith.addf %96, %97 : vector<1x512xf32>
    %99 = arith.mulf %98, %94 : vector<1x512xf32>
    %cst_39 = arith.constant 1.42141378 : f32
    %100 = vector.broadcast %cst_39 : f32 to vector<1x512xf32>
    %101 = arith.addf %99, %100 : vector<1x512xf32>
    %102 = arith.mulf %101, %94 : vector<1x512xf32>
    %cst_40 = arith.constant -0.284496725 : f32
    %103 = vector.broadcast %cst_40 : f32 to vector<1x512xf32>
    %104 = arith.addf %102, %103 : vector<1x512xf32>
    %105 = arith.mulf %104, %94 : vector<1x512xf32>
    %cst_41 = arith.constant 0.254829586 : f32
    %106 = vector.broadcast %cst_41 : f32 to vector<1x512xf32>
    %107 = arith.addf %105, %106 : vector<1x512xf32>
    %108 = arith.mulf %107, %94 : vector<1x512xf32>
    %cst_42 = arith.constant 0.000000e+00 : f32
    %109 = vector.broadcast %cst_42 : f32 to vector<1x512xf32>
    %110 = arith.subf %109, %85 : vector<1x512xf32>
    %111 = arith.mulf %110, %85 : vector<1x512xf32>
    %112 = math.exp %111 : vector<1x512xf32>
    %113 = arith.mulf %108, %112 : vector<1x512xf32>
    %cst_43 = arith.constant 1.000000e+00 : f32
    %114 = vector.broadcast %cst_43 : f32 to vector<1x512xf32>
    %115 = arith.subf %114, %113 : vector<1x512xf32>
    %116 = arith.mulf %84, %115 : vector<1x512xf32>
    %cst_44 = arith.constant 1.000000e+00 : f32
    %117 = vector.broadcast %cst_44 : f32 to vector<1x512xf32>
    %118 = arith.addf %117, %116 : vector<1x512xf32>
    %119 = arith.mulf %77, %118 : vector<1x512xf32>
    %c0_45 = arith.constant 0 : index
    %c0_46 = arith.constant 0 : index
    %120 = vector.load %arg10[%c0_45, %c0_46] : memref<1x512xf32, #tpu.memory_space<vmem>>, vector<1x512xf32>
    %c0_47 = arith.constant 0 : index
    %c0_48 = arith.constant 0 : index
    %121 = vector.load %arg11[%c0_47, %c0_48] : memref<1x512xf32, #tpu.memory_space<vmem>>, vector<1x512xf32>
    %cst_49 = arith.constant dense<0.000000e+00> : vector<1xf32>
    %122 = vector.multi_reduction <add>, %119, %cst_49 [1] : vector<1x512xf32> to vector<1xf32>
    %123 = vector.shape_cast %122 : vector<1xf32> to vector<1x1xf32>
    %cst_50 = arith.constant 5.120000e+02 : f32
    %124 = vector.broadcast %cst_50 : f32 to vector<1x1xf32>
    %125 = arith.divf %123, %124 : vector<1x1xf32>
    %126 = vector.broadcast %125 : vector<1x1xf32> to vector<1x512xf32>
    %127 = arith.subf %119, %126 : vector<1x512xf32>
    %128 = arith.mulf %127, %127 : vector<1x512xf32>
    %cst_51 = arith.constant dense<0.000000e+00> : vector<1xf32>
    %129 = vector.multi_reduction <add>, %128, %cst_51 [1] : vector<1x512xf32> to vector<1xf32>
    %130 = vector.shape_cast %129 : vector<1xf32> to vector<1x1xf32>
    %cst_52 = arith.constant 5.120000e+02 : f32
    %131 = vector.broadcast %cst_52 : f32 to vector<1x1xf32>
    %132 = arith.divf %130, %131 : vector<1x1xf32>
    %133 = vector.broadcast %125 : vector<1x1xf32> to vector<1x512xf32>
    %134 = arith.subf %119, %133 : vector<1x512xf32>
    %cst_53 = arith.constant 9.99999974E-6 : f32
    %135 = vector.broadcast %cst_53 : f32 to vector<1x1xf32>
    %136 = arith.addf %132, %135 : vector<1x1xf32>
    %137 = math.rsqrt %136 : vector<1x1xf32>
    %138 = vector.broadcast %137 : vector<1x1xf32> to vector<1x512xf32>
    %139 = arith.mulf %134, %138 : vector<1x512xf32>
    %140 = arith.mulf %139, %120 : vector<1x512xf32>
    %141 = arith.addf %140, %121 : vector<1x512xf32>
    %c0_54 = arith.constant 0 : index
    %c0_55 = arith.constant 0 : index
    %142 = vector.load %arg12[%c0_54, %c0_55] : memref<512x128xf32, #tpu.memory_space<vmem>>, vector<512x128xf32>
    %cst_56 = arith.constant dense<0.000000e+00> : vector<1x128xf32>
    %143 = tpu.matmul %141, %142, %cst_56 {dimension_numbers = #tpu.dot_dimension_numbers<[1], [0], [0], [1], [0, 0, 1, 1], [], []>} : vector<1x512xf32>, vector<512x128xf32>, vector<1x128xf32> -> vector<1x128xf32>
    %c0_57 = arith.constant 0 : index
    %c0_58 = arith.constant 0 : index
    %144 = vector.load %arg13[%c0_57, %c0_58] : memref<1x128xf32, #tpu.memory_space<vmem>>, vector<1x128xf32>
    %145 = arith.addf %143, %144 : vector<1x128xf32>
    %c0_59 = arith.constant 0 : index
    %c0_60 = arith.constant 0 : index
    %146 = vector.load %arg14[%c0_59, %c0_60] : memref<1x128xf32, #tpu.memory_space<vmem>>, vector<1x128xf32>
    %c0_61 = arith.constant 0 : index
    %c0_62 = arith.constant 0 : index
    %147 = vector.load %arg15[%c0_61, %c0_62] : memref<1x128xf32, #tpu.memory_space<vmem>>, vector<1x128xf32>
    %cst_63 = arith.constant dense<0.000000e+00> : vector<1xf32>
    %148 = vector.multi_reduction <add>, %145, %cst_63 [1] : vector<1x128xf32> to vector<1xf32>
    %149 = vector.shape_cast %148 : vector<1xf32> to vector<1x1xf32>
    %cst_64 = arith.constant 1.280000e+02 : f32
    %150 = vector.broadcast %cst_64 : f32 to vector<1x1xf32>
    %151 = arith.divf %149, %150 : vector<1x1xf32>
    %152 = vector.broadcast %151 : vector<1x1xf32> to vector<1x128xf32>
    %153 = arith.subf %145, %152 : vector<1x128xf32>
    %154 = arith.mulf %153, %153 : vector<1x128xf32>
    %cst_65 = arith.constant dense<0.000000e+00> : vector<1xf32>
    %155 = vector.multi_reduction <add>, %154, %cst_65 [1] : vector<1x128xf32> to vector<1xf32>
    %156 = vector.shape_cast %155 : vector<1xf32> to vector<1x1xf32>
    %cst_66 = arith.constant 1.280000e+02 : f32
    %157 = vector.broadcast %cst_66 : f32 to vector<1x1xf32>
    %158 = arith.divf %156, %157 : vector<1x1xf32>
    %159 = vector.broadcast %151 : vector<1x1xf32> to vector<1x128xf32>
    %160 = arith.subf %145, %159 : vector<1x128xf32>
    %cst_67 = arith.constant 9.99999974E-6 : f32
    %161 = vector.broadcast %cst_67 : f32 to vector<1x1xf32>
    %162 = arith.addf %158, %161 : vector<1x1xf32>
    %163 = math.rsqrt %162 : vector<1x1xf32>
    %164 = vector.broadcast %163 : vector<1x1xf32> to vector<1x128xf32>
    %165 = arith.mulf %160, %164 : vector<1x128xf32>
    %166 = arith.mulf %165, %146 : vector<1x128xf32>
    %167 = arith.addf %166, %147 : vector<1x128xf32>
    %168 = arith.mulf %63, %167 : vector<1x128xf32>
    %169 = arith.addf %68, %168 : vector<1x128xf32>
    %c0_68 = arith.constant 0 : index
    %c0_69 = arith.constant 0 : index
    %c0_70 = arith.constant 0 : index
    %170 = vector.load %arg16[%c0_68, %c0_69, %c0_70] : memref<1x1x128xf32, #tpu.memory_space<vmem>>, vector<1x1x128xf32>
    %171 = vector.shape_cast %170 : vector<1x1x128xf32> to vector<1x128xf32>
    %172 = vector.shape_cast %169 : vector<1x128xf32> to vector<1x1x128xf32>
    tpu.vector_store %arg16[%c0_68, %c0_69, %c0_70], %172 {strides = array<i32>} : memref<1x1x128xf32, #tpu.memory_space<vmem>>, vector<1x1x128xf32>,
    %c0_71 = arith.constant 0 : index
    %c0_72 = arith.constant 0 : index
    %173 = vector.load %arg17[%c0_71, %c0_72] : memref<1x128xf32, #tpu.memory_space<vmem>>, vector<1x128xf32>
    tpu.vector_store %arg17[%c0_71, %c0_72], %12 {strides = array<i32>} : memref<1x128xf32, #tpu.memory_space<vmem>>, vector<1x128xf32>,
    %c0_73 = arith.constant 0 : index
    %c0_74 = arith.constant 0 : index
    %174 = vector.load %arg18[%c0_73, %c0_74] : memref<1x128xf32, #tpu.memory_space<vmem>>, vector<1x128xf32>
    tpu.vector_store %arg18[%c0_73, %c0_74], %16 {strides = array<i32>} : memref<1x128xf32, #tpu.memory_space<vmem>>, vector<1x128xf32>,
    return
  }
  func.func @transform_0(%arg0: i32) -> i32 {
    %c0_i32 = arith.constant 0 : i32
    %c0_i32_0 = arith.constant 0 : i32
    return %c0_i32 : i32
  }
  func.func @transform_1(%arg0: i32) -> (i32, i32, i32) {
    %c0_i32 = arith.constant 0 : i32
    %c0_i32_0 = arith.constant 0 : i32
    %c0_i32_1 = arith.constant 0 : i32
    return %arg0, %c0_i32, %c0_i32_0 : i32, i32, i32
  }
  func.func @transform_2(%arg0: i32) -> (i32, i32) {
    %c0_i32 = arith.constant 0 : i32
    %c0_i32_0 = arith.constant 0 : i32
    %c0_i32_1 = arith.constant 0 : i32
    return %c0_i32, %c0_i32_0 : i32, i32
  }
  func.func @transform_3(%arg0: i32) -> (i32, i32) {
    %c0_i32 = arith.constant 0 : i32
    %c0_i32_0 = arith.constant 0 : i32
    %c0_i32_1 = arith.constant 0 : i32
    return %c0_i32, %c0_i32_0 : i32, i32
  }
  func.func @transform_4(%arg0: i32) -> (i32, i32) {
    %c0_i32 = arith.constant 0 : i32
    %c0_i32_0 = arith.constant 0 : i32
    %c0_i32_1 = arith.constant 0 : i32
    return %c0_i32, %c0_i32_0 : i32, i32
  }
  func.func @transform_5(%arg0: i32) -> (i32, i32) {
    %c0_i32 = arith.constant 0 : i32
    %c0_i32_0 = arith.constant 0 : i32
    %c0_i32_1 = arith.constant 0 : i32
    return %c0_i32, %c0_i32_0 : i32, i32
  }
  func.func @transform_6(%arg0: i32) -> (i32, i32) {
    %c0_i32 = arith.constant 0 : i32
    %c0_i32_0 = arith.constant 0 : i32
    %c0_i32_1 = arith.constant 0 : i32
    return %c0_i32, %c0_i32_0 : i32, i32
  }
  func.func @transform_7(%arg0: i32) -> (i32, i32) {
    %c0_i32 = arith.constant 0 : i32
    %c0_i32_0 = arith.constant 0 : i32
    %c0_i32_1 = arith.constant 0 : i32
    return %c0_i32, %c0_i32_0 : i32, i32
  }
  func.func @transform_8(%arg0: i32) -> (i32, i32) {
    %c0_i32 = arith.constant 0 : i32
    %c0_i32_0 = arith.constant 0 : i32
    %c0_i32_1 = arith.constant 0 : i32
    return %c0_i32, %c0_i32_0 : i32, i32
  }
  func.func @transform_9(%arg0: i32) -> (i32, i32) {
    %c0_i32 = arith.constant 0 : i32
    %c0_i32_0 = arith.constant 0 : i32
    %c0_i32_1 = arith.constant 0 : i32
    return %c0_i32, %c0_i32_0 : i32, i32
  }
  func.func @transform_10(%arg0: i32) -> (i32, i32) {
    %c0_i32 = arith.constant 0 : i32
    %c0_i32_0 = arith.constant 0 : i32
    %c0_i32_1 = arith.constant 0 : i32
    return %c0_i32, %c0_i32_0 : i32, i32
  }
  func.func @transform_11(%arg0: i32) -> (i32, i32) {
    %c0_i32 = arith.constant 0 : i32
    %c0_i32_0 = arith.constant 0 : i32
    %c0_i32_1 = arith.constant 0 : i32
    return %c0_i32, %c0_i32_0 : i32, i32
  }
  func.func @transform_12(%arg0: i32) -> (i32, i32) {
    %c0_i32 = arith.constant 0 : i32
    %c0_i32_0 = arith.constant 0 : i32
    %c0_i32_1 = arith.constant 0 : i32
    return %c0_i32, %c0_i32_0 : i32, i32
  }
  func.func @transform_13(%arg0: i32) -> (i32, i32) {
    %c0_i32 = arith.constant 0 : i32
    %c0_i32_0 = arith.constant 0 : i32
    %c0_i32_1 = arith.constant 0 : i32
    return %c0_i32, %c0_i32_0 : i32, i32
  }
  func.func @transform_14(%arg0: i32) -> (i32, i32) {
    %c0_i32 = arith.constant 0 : i32
    %c0_i32_0 = arith.constant 0 : i32
    %c0_i32_1 = arith.constant 0 : i32
    return %c0_i32, %c0_i32_0 : i32, i32
  }
  func.func @transform_15(%arg0: i32) -> (i32, i32, i32) {
    %c0_i32 = arith.constant 0 : i32
    %c0_i32_0 = arith.constant 0 : i32
    %c0_i32_1 = arith.constant 0 : i32
    return %arg0, %c0_i32, %c0_i32_0 : i32, i32, i32
  }
  func.func @transform_16(%arg0: i32) -> (i32, i32) {
    %c0_i32 = arith.constant 0 : i32
    %c0_i32_0 = arith.constant 0 : i32
    %c0_i32_1 = arith.constant 0 : i32
    return %c0_i32, %c0_i32_0 : i32, i32
  }
  func.func @transform_17(%arg0: i32) -> (i32, i32) {
    %c0_i32 = arith.constant 0 : i32
    %c0_i32_0 = arith.constant 0 : i32
    %c0_i32_1 = arith.constant 0 : i32
    return %c0_i32, %c0_i32_0 : i32, i32
  }
}

</mosaic_0001>

<llo_original>
// kernel: memory_forward.1
$region0: #{memory_forward.1}
  #allocation0 [shape = 'u32[]', space=smem, size = 0x4, offset = 0x4, fixed_abs, tag = 'smem constant byte address 0x4 - core index']
  #allocation1 [shape = 'u32[72,128]{1,0:T(1,128)}', space=vmem, size = 0x9000, scoped, tag = 'internal scratch']
  %s0 = inlined_call_operand.vmem [shape: f32[2], index: 0, kind: input, shape index: {}]
  %s1 = inlined_call_operand.vmem [shape: f32[8,1,128], index: 1, kind: input, shape index: {}]
  %s2 = inlined_call_operand.hbm [shape: f32[1,128], index: 2, kind: input, shape index: {}, may-alias: {2,16}]
  %s3 = inlined_call_operand.hbm [shape: f32[1,128], index: 3, kind: input, shape index: {}, may-alias: {3,17}]
  %s4 = inlined_call_operand.hbm [shape: f32[128,512], index: 4, kind: input, shape index: {}]
  %s5 = inlined_call_operand.hbm [shape: f32[1,512], index: 5, kind: input, shape index: {}]
  %s6 = inlined_call_operand.hbm [shape: f32[128,512], index: 6, kind: input, shape index: {}]
  %s7 = inlined_call_operand.hbm [shape: f32[128,512], index: 7, kind: input, shape index: {}]
  %s8 = inlined_call_operand.hbm [shape: f32[1,512], index: 8, kind: input, shape index: {}]
  %s9 = inlined_call_operand.hbm [shape: f32[1,512], index: 9, kind: input, shape index: {}]
  %s10 = inlined_call_operand.hbm [shape: f32[1,512], index: 10, kind: input, shape index: {}]
  %s11 = inlined_call_operand.hbm [shape: f32[512,128], index: 11, kind: input, shape index: {}]
  %s12 = inlined_call_operand.vmem [shape: f32[1,128], index: 12, kind: input, shape index: {}]
  %s13 = inlined_call_operand.vmem [shape: f32[1,128], index: 13, kind: input, shape index: {}]
  %s14 = inlined_call_operand.vmem [shape: f32[1,128], index: 14, kind: input, shape index: {}]
  %s15 = inlined_call_operand.hbm [shape: f32[8,1,128], index: 15, kind: output, shape index: {0}]
  %s16 = inlined_call_operand.hbm [shape: f32[1,128], index: 16, kind: output, shape index: {1}, may-alias: {2,16}]
  %s17 = inlined_call_operand.hbm [shape: f32[1,128], index: 17, kind: output, shape index: {2}, may-alias: {3,17}]
  %18 = xla_tuple %s15, %s16, %s17
  %s19 = sld [smem:[#allocation0]]
  $region157: #{memory_forward.1} parent=0
    _
  %s21 = ssub.s32 1, %s19
  %s22 = scalar_select 0, %s21, %s19
  $region1: #{memory_forward.1} parent=0
    #allocation2 [shape = 'u8[512]{0}', space=smem, size = 0x200, scoped, tag = 'input window, operand 0, single buffered']
    #allocation3 [shape = 's32[2]{0}', space=sflag, size = 0x8, scoped, tag = 'scoped memory for memory_forward.1']
    #allocation4 [shape = 's32[2]{0}', space=sflag, size = 0x8, scoped, tag = 'scoped memory for memory_forward.1']
    #allocation5 [shape = 's32[2]{0}', space=sflag, size = 0x8, scoped, tag = 'scoped memory for memory_forward.1']
    #allocation6 [shape = 'u8[512]{0}', space=vmem, size = 0x400, scoped, tag = 'input window, operand 2, single buffered']
    #allocation7 [shape = 'u8[512]{0}', space=vmem, size = 0x400, scoped, tag = 'input window, operand 3, single buffered']
    #allocation8 [shape = 's32[1]{0}', space=sflag, size = 0x4, scoped, tag = 'scoped memory for memory_forward.1']
    #allocation9 [shape = 'u8[262144]{0}', space=vmem, size = 0x40000, scoped, tag = 'input window, operand 4, single buffered']
    #allocation10 [shape = 'u8[2048]{0}', space=vmem, size = 0x800, scoped, tag = 'input window, operand 5, single buffered']
    #allocation11 [shape = 's32[1]{0}', space=sflag, size = 0x4, scoped, tag = 'scoped memory for memory_forward.1']
    #allocation12 [shape = 'u8[262144]{0}', space=vmem, size = 0x40000, scoped, tag = 'input window, operand 6, single buffered']
    #allocation13 [shape = 'u8[262144]{0}', space=vmem, size = 0x40000, scoped, tag = 'input window, operand 7, single buffered']
    #allocation14 [shape = 's32[1]{0}', space=sflag, size = 0x4, scoped, tag = 'scoped memory for memory_forward.1']
    #allocation15 [shape = 'u8[2048]{0}', space=vmem, size = 0x800, scoped, tag = 'input window, operand 8, single buffered']
    #allocation16 [shape = 'u8[2048]{0}', space=vmem, size = 0x800, scoped, tag = 'input window, operand 9, single buffered']
    #allocation17 [shape = 's32[1]{0}', space=sflag, size = 0x4, scoped, tag = 'scoped memory for memory_forward.1']
    #allocation18 [shape = 'u8[2048]{0}', space=vmem, size = 0x800, scoped, tag = 'input window, operand 10, single buffered']
    #allocation19 [shape = 'u8[262144]{0}', space=vmem, size = 0x40000, scoped, tag = 'input window, operand 11, single buffered']
    #allocation20 [shape = 's32[1]{0}', space=sflag, size = 0x4, scoped, tag = 'scoped memory for memory_forward.1']
    #allocation21 [shape = 'u8[1024]{0}', space=vmem, size = 0x400, scoped, tag = 'output window, operand 0']
    #allocation22 [shape = 'u8[512]{0}', space=vmem, size = 0x400, scoped, tag = 'output window, operand 1, single buffered']
    #allocation23 [shape = 's32[1]{0}', space=sflag, size = 0x4, scoped, tag = 'scoped memory for memory_forward.1']
    #allocation24 [shape = 'u8[512]{0}', space=vmem, size = 0x400, scoped, tag = 'output window, operand 2, single buffered']
    %23 = vsyncpa [#allocation5], 0
    %24 = vsyncpa [#allocation3], 0
    %25 = vsyncpa [#allocation8], 0
    %26 = vsyncpa [#allocation11], 0
    %27 = vsyncpa [#allocation14], 0
    %28 = vsyncpa [#allocation17], 0
    %29 = vsyncpa [#allocation20], 0
    %30 = vsyncpa [#allocation4], 0
    %s31 = scalar_lea.sflag [#allocation4], 1
    %32 = vsyncpa %s31, 0
    %33 = vsyncpa [#allocation23], 0
    loop: start=0, step=1, limit=10
    $region2: #{memory_forward.1} parent=1 // loop_pre_header
      _
    $region3: #{memory_forward.1} parent=1 // loop_header
      %s35 = sphi 0, %s39
      %p36 = scmp.ge.s32.totalorder %s35, 10
      %s43 = sphi 0, %s43
      %s45 = sphi 0, %s43
      %s46 = sphi 0, %s45
      %s60 = sphi 0, %s46
      %s66 = sphi 0, %s68
      %s69 = sphi 0, %s66
      %s70 = sphi 0, %s69
      %s86 = sphi 0, %s70
      %s90 = sphi 0, %s90
      %s92 = sphi 0, %s90
      %s93 = sphi 0, %s92
      %s107 = sphi 0, %s93
      %s111 = sphi 0, %s111
      %s113 = sphi 0, %s111
      %s114 = sphi 0, %s113
      %s128 = sphi 0, %s114
      %s132 = sphi 0, %s132
      %s134 = sphi 0, %s132
      %s135 = sphi 0, %s134
      %s149 = sphi 0, %s135
      %s153 = sphi 0, %s153
      %s155 = sphi 0, %s153
      %s156 = sphi 0, %s155
      %s170 = sphi 0, %s156
      %s174 = sphi 0, %s174
      %s176 = sphi 0, %s174
      %s177 = sphi 0, %s176
      %s191 = sphi 0, %s177
      %s195 = sphi 0, %s195
      %s197 = sphi 0, %s195
      %s198 = sphi 0, %s197
      %s212 = sphi 0, %s198
      %s216 = sphi 0, %s216
      %s218 = sphi 0, %s216
      %s219 = sphi 0, %s218
      %s233 = sphi 0, %s219
      %s237 = sphi 0, %s237
      %s239 = sphi 0, %s237
      %s240 = sphi 0, %s239
      %s254 = sphi 0, %s240
      %s258 = sphi 0, %s258
      %s260 = sphi 0, %s258
      %s261 = sphi 0, %s260
      %s275 = sphi 0, %s261
      %s279 = sphi 0, %s279
      %s281 = sphi 0, %s279
      %s282 = sphi 0, %s281
      %s296 = sphi 0, %s282
      %s300 = sphi 0, %s300
      %s302 = sphi 0, %s300
      %s303 = sphi 0, %s302
      %s317 = sphi 0, %s303
      %s321 = sphi 0, %s321
      %s323 = sphi 0, %s321
      %s324 = sphi 0, %s323
      %s338 = sphi 0, %s324
      %s342 = sphi 0, %s342
      %s344 = sphi 0, %s342
      %s345 = sphi 0, %s344
      %s359 = sphi 0, %s345
      %s365 = sphi 0, %s367
      %s368 = sphi 0, %s365
      %s369 = sphi 0, %s368
      %s385 = sphi 0, %s369
      %s389 = sphi 0, %s389
      %s391 = sphi 0, %s389
      %s392 = sphi 0, %s391
      %s406 = sphi 0, %s392
      %s410 = sphi 0, %s410
      %s412 = sphi 0, %s410
      %s413 = sphi 0, %s412
      %s427 = sphi 0, %s413
    $region4: #{memory_forward.1} parent=1 // loop_header_branch
      %38 = sbr.rel (%p36) target = $region8
    $region5: #{memory_forward.1} parent=1 // loop_body
      %s40 = ssub.s32 %s35, 1
      %s41 = ssub.s32 %s35, 2
      %s42 = sadd.s32 %s35, 1
      %s44 = sadd.s32 %s43, 1
      %p47 = scmp.eq.s32.totalorder %s35, 7
      %p48 = scmp.ne.s32.totalorder %s43, %s45
      %p49 = scmp.eq.s32.totalorder %s35, 0
      %p50 = por %p48, %p49
      %p51 = scmp.ne.s32.totalorder %s43, %s45
      %p52 = scmp.eq.s32.totalorder %s40, 7
      %p53 = por %p51, %p52
      %p54 = scmp.ne.s32.totalorder %s45, %s46
      %p55 = scmp.eq.s32.totalorder %s40, 0
      %p56 = por %p54, %p55
      %p57 = scmp.ne.s32.totalorder %s45, %s46
      %p58 = scmp.eq.s32.totalorder %s41, 7
      %p59 = por %p57, %p58
      %p61 = scmp.ne.s32.totalorder %s46, %s60
      %p62 = scmp.eq.s32.totalorder %s41, 0
      %p63 = por %p61, %p62
      %s64 = ssub.s32 %s35, %s42
      %p65 = scmp.eq.s32.totalorder %s64, 0
      %s67 = sadd.s32 %s66, 1
      %s68 = scalar_select %p65, %s66, %s67
      %p71 = pneg %p65
      %p72 = scmp.eq.s32.totalorder %s35, 7
      %p73 = por %p71, %p72
      %p74 = scmp.ne.s32.totalorder %s66, %s69
      %p75 = scmp.eq.s32.totalorder %s35, 0
      %p76 = por %p74, %p75
      %p77 = scmp.ne.s32.totalorder %s66, %s69
      %p78 = scmp.eq.s32.totalorder %s40, 7
      %p79 = por %p77, %p78
      %p80 = scmp.ne.s32.totalorder %s69, %s70
      %p81 = scmp.eq.s32.totalorder %s40, 0
      %p82 = por %p80, %p81
      %p83 = scmp.ne.s32.totalorder %s69, %s70
      %p84 = scmp.eq.s32.totalorder %s41, 7
      %p85 = por %p83, %p84
      %p87 = scmp.ne.s32.totalorder %s70, %s86
      %p88 = scmp.eq.s32.totalorder %s41, 0
      %p89 = por %p87, %p88
      %s91 = sadd.s32 %s90, 1
      %p94 = scmp.eq.s32.totalorder %s35, 7
      %p95 = scmp.ne.s32.totalorder %s90, %s92
      %p96 = scmp.eq.s32.totalorder %s35, 0
      %p97 = por %p95, %p96
      %p98 = scmp.ne.s32.totalorder %s90, %s92
      %p99 = scmp.eq.s32.totalorder %s40, 7
      %p100 = por %p98, %p99
      %p101 = scmp.ne.s32.totalorder %s92, %s93
      %p102 = scmp.eq.s32.totalorder %s40, 0
      %p103 = por %p101, %p102
      %p104 = scmp.ne.s32.totalorder %s92, %s93
      %p105 = scmp.eq.s32.totalorder %s41, 7
      %p106 = por %p104, %p105
      %p108 = scmp.ne.s32.totalorder %s93, %s107
      %p109 = scmp.eq.s32.totalorder %s41, 0
      %p110 = por %p108, %p109
      %s112 = sadd.s32 %s111, 1
      %p115 = scmp.eq.s32.totalorder %s35, 7
      %p116 = scmp.ne.s32.totalorder %s111, %s113
      %p117 = scmp.eq.s32.totalorder %s35, 0
      %p118 = por %p116, %p117
      %p119 = scmp.ne.s32.totalorder %s111, %s113
      %p120 = scmp.eq.s32.totalorder %s40, 7
      %p121 = por %p119, %p120
      %p122 = scmp.ne.s32.totalorder %s113, %s114
      %p123 = scmp.eq.s32.totalorder %s40, 0
      %p124 = por %p122, %p123
      %p125 = scmp.ne.s32.totalorder %s113, %s114
      %p126 = scmp.eq.s32.totalorder %s41, 7
      %p127 = por %p125, %p126
      %p129 = scmp.ne.s32.totalorder %s114, %s128
      %p130 = scmp.eq.s32.totalorder %s41, 0
      %p131 = por %p129, %p130
      %s133 = sadd.s32 %s132, 1
      %p136 = scmp.eq.s32.totalorder %s35, 7
      %p137 = scmp.ne.s32.totalorder %s132, %s134
      %p138 = scmp.eq.s32.totalorder %s35, 0
      %p139 = por %p137, %p138
      %p140 = scmp.ne.s32.totalorder %s132, %s134
      %p141 = scmp.eq.s32.totalorder %s40, 7
      %p142 = por %p140, %p141
      %p143 = scmp.ne.s32.totalorder %s134, %s135
      %p144 = scmp.eq.s32.totalorder %s40, 0
      %p145 = por %p143, %p144
      %p146 = scmp.ne.s32.totalorder %s134, %s135
      %p147 = scmp.eq.s32.totalorder %s41, 7
      %p148 = por %p146, %p147
      %p150 = scmp.ne.s32.totalorder %s135, %s149
      %p151 = scmp.eq.s32.totalorder %s41, 0
      %p152 = por %p150, %p151
      %s154 = sadd.s32 %s153, 1
      %p157 = scmp.eq.s32.totalorder %s35, 7
      %p158 = scmp.ne.s32.totalorder %s153, %s155
      %p159 = scmp.eq.s32.totalorder %s35, 0
      %p160 = por %p158, %p159
      %p161 = scmp.ne.s32.totalorder %s153, %s155
      %p162 = scmp.eq.s32.totalorder %s40, 7
      %p163 = por %p161, %p162
      %p164 = scmp.ne.s32.totalorder %s155, %s156
      %p165 = scmp.eq.s32.totalorder %s40, 0
      %p166 = por %p164, %p165
      %p167 = scmp.ne.s32.totalorder %s155, %s156
      %p168 = scmp.eq.s32.totalorder %s41, 7
      %p169 = por %p167, %p168
      %p171 = scmp.ne.s32.totalorder %s156, %s170
      %p172 = scmp.eq.s32.totalorder %s41, 0
      %p173 = por %p171, %p172
      %s175 = sadd.s32 %s174, 1
      %p178 = scmp.eq.s32.totalorder %s35, 7
      %p179 = scmp.ne.s32.totalorder %s174, %s176
      %p180 = scmp.eq.s32.totalorder %s35, 0
      %p181 = por %p179, %p180
      %p182 = scmp.ne.s32.totalorder %s174, %s176
      %p183 = scmp.eq.s32.totalorder %s40, 7
      %p184 = por %p182, %p183
      %p185 = scmp.ne.s32.totalorder %s176, %s177
      %p186 = scmp.eq.s32.totalorder %s40, 0
      %p187 = por %p185, %p186
      %p188 = scmp.ne.s32.totalorder %s176, %s177
      %p189 = scmp.eq.s32.totalorder %s41, 7
      %p190 = por %p188, %p189
      %p192 = scmp.ne.s32.totalorder %s177, %s191
      %p193 = scmp.eq.s32.totalorder %s41, 0
      %p194 = por %p192, %p193
      %s196 = sadd.s32 %s195, 1
      %p199 = scmp.eq.s32.totalorder %s35, 7
      %p200 = scmp.ne.s32.totalorder %s195, %s197
      %p201 = scmp.eq.s32.totalorder %s35, 0
      %p202 = por %p200, %p201
      %p203 = scmp.ne.s32.totalorder %s195, %s197
      %p204 = scmp.eq.s32.totalorder %s40, 7
      %p205 = por %p203, %p204
      %p206 = scmp.ne.s32.totalorder %s197, %s198
      %p207 = scmp.eq.s32.totalorder %s40, 0
      %p208 = por %p206, %p207
      %p209 = scmp.ne.s32.totalorder %s197, %s198
      %p210 = scmp.eq.s32.totalorder %s41, 7
      %p211 = por %p209, %p210
      %p213 = scmp.ne.s32.totalorder %s198, %s212
      %p214 = scmp.eq.s32.totalorder %s41, 0
      %p215 = por %p213, %p214
      %s217 = sadd.s32 %s216, 1
      %p220 = scmp.eq.s32.totalorder %s35, 7
      %p221 = scmp.ne.s32.totalorder %s216, %s218
      %p222 = scmp.eq.s32.totalorder %s35, 0
      %p223 = por %p221, %p222
      %p224 = scmp.ne.s32.totalorder %s216, %s218
      %p225 = scmp.eq.s32.totalorder %s40, 7
      %p226 = por %p224, %p225
      %p227 = scmp.ne.s32.totalorder %s218, %s219
      %p228 = scmp.eq.s32.totalorder %s40, 0
      %p229 = por %p227, %p228
      %p230 = scmp.ne.s32.totalorder %s218, %s219
      %p231 = scmp.eq.s32.totalorder %s41, 7
      %p232 = por %p230, %p231
      %p234 = scmp.ne.s32.totalorder %s219, %s233
      %p235 = scmp.eq.s32.totalorder %s41, 0
      %p236 = por %p234, %p235
      %s238 = sadd.s32 %s237, 1
      %p241 = scmp.eq.s32.totalorder %s35, 7
      %p242 = scmp.ne.s32.totalorder %s237, %s239
      %p243 = scmp.eq.s32.totalorder %s35, 0
      %p244 = por %p242, %p243
      %p245 = scmp.ne.s32.totalorder %s237, %s239
      %p246 = scmp.eq.s32.totalorder %s40, 7
      %p247 = por %p245, %p246
      %p248 = scmp.ne.s32.totalorder %s239, %s240
      %p249 = scmp.eq.s32.totalorder %s40, 0
      %p250 = por %p248, %p249
      %p251 = scmp.ne.s32.totalorder %s239, %s240
      %p252 = scmp.eq.s32.totalorder %s41, 7
      %p253 = por %p251, %p252
      %p255 = scmp.ne.s32.totalorder %s240, %s254
      %p256 = scmp.eq.s32.totalorder %s41, 0
      %p257 = por %p255, %p256
      %s259 = sadd.s32 %s258, 1
      %p262 = scmp.eq.s32.totalorder %s35, 7
      %p263 = scmp.ne.s32.totalorder %s258, %s260
      %p264 = scmp.eq.s32.totalorder %s35, 0
      %p265 = por %p263, %p264
      %p266 = scmp.ne.s32.totalorder %s258, %s260
      %p267 = scmp.eq.s32.totalorder %s40, 7
      %p268 = por %p266, %p267
      %p269 = scmp.ne.s32.totalorder %s260, %s261
      %p270 = scmp.eq.s32.totalorder %s40, 0
      %p271 = por %p269, %p270
      %p272 = scmp.ne.s32.totalorder %s260, %s261
      %p273 = scmp.eq.s32.totalorder %s41, 7
      %p274 = por %p272, %p273
      %p276 = scmp.ne.s32.totalorder %s261, %s275
      %p277 = scmp.eq.s32.totalorder %s41, 0
      %p278 = por %p276, %p277
      %s280 = sadd.s32 %s279, 1
      %p283 = scmp.eq.s32.totalorder %s35, 7
      %p284 = scmp.ne.s32.totalorder %s279, %s281
      %p285 = scmp.eq.s32.totalorder %s35, 0
      %p286 = por %p284, %p285
      %p287 = scmp.ne.s32.totalorder %s279, %s281
      %p288 = scmp.eq.s32.totalorder %s40, 7
      %p289 = por %p287, %p288
      %p290 = scmp.ne.s32.totalorder %s281, %s282
      %p291 = scmp.eq.s32.totalorder %s40, 0
      %p292 = por %p290, %p291
      %p293 = scmp.ne.s32.totalorder %s281, %s282
      %p294 = scmp.eq.s32.totalorder %s41, 7
      %p295 = por %p293, %p294
      %p297 = scmp.ne.s32.totalorder %s282, %s296
      %p298 = scmp.eq.s32.totalorder %s41, 0
      %p299 = por %p297, %p298
      %s301 = sadd.s32 %s300, 1
      %p304 = scmp.eq.s32.totalorder %s35, 7
      %p305 = scmp.ne.s32.totalorder %s300, %s302
      %p306 = scmp.eq.s32.totalorder %s35, 0
      %p307 = por %p305, %p306
      %p308 = scmp.ne.s32.totalorder %s300, %s302
      %p309 = scmp.eq.s32.totalorder %s40, 7
      %p310 = por %p308, %p309
      %p311 = scmp.ne.s32.totalorder %s302, %s303
      %p312 = scmp.eq.s32.totalorder %s40, 0
      %p313 = por %p311, %p312
      %p314 = scmp.ne.s32.totalorder %s302, %s303
      %p315 = scmp.eq.s32.totalorder %s41, 7
      %p316 = por %p314, %p315
      %p318 = scmp.ne.s32.totalorder %s303, %s317
      %p319 = scmp.eq.s32.totalorder %s41, 0
      %p320 = por %p318, %p319
      %s322 = sadd.s32 %s321, 1
      %p325 = scmp.eq.s32.totalorder %s35, 7
      %p326 = scmp.ne.s32.totalorder %s321, %s323
      %p327 = scmp.eq.s32.totalorder %s35, 0
      %p328 = por %p326, %p327
      %p329 = scmp.ne.s32.totalorder %s321, %s323
      %p330 = scmp.eq.s32.totalorder %s40, 7
      %p331 = por %p329, %p330
      %p332 = scmp.ne.s32.totalorder %s323, %s324
      %p333 = scmp.eq.s32.totalorder %s40, 0
      %p334 = por %p332, %p333
      %p335 = scmp.ne.s32.totalorder %s323, %s324
      %p336 = scmp.eq.s32.totalorder %s41, 7
      %p337 = por %p335, %p336
      %p339 = scmp.ne.s32.totalorder %s324, %s338
      %p340 = scmp.eq.s32.totalorder %s41, 0
      %p341 = por %p339, %p340
      %s343 = sadd.s32 %s342, 1
      %p346 = scmp.eq.s32.totalorder %s35, 7
      %p347 = scmp.ne.s32.totalorder %s342, %s344
      %p348 = scmp.eq.s32.totalorder %s35, 0
      %p349 = por %p347, %p348
      %p350 = scmp.ne.s32.totalorder %s342, %s344
      %p351 = scmp.eq.s32.totalorder %s40, 7
      %p352 = por %p350, %p351
      %p353 = scmp.ne.s32.totalorder %s344, %s345
      %p354 = scmp.eq.s32.totalorder %s40, 0
      %p355 = por %p353, %p354
      %p356 = scmp.ne.s32.totalorder %s344, %s345
      %p357 = scmp.eq.s32.totalorder %s41, 7
      %p358 = por %p356, %p357
      %p360 = scmp.ne.s32.totalorder %s345, %s359
      %p361 = scmp.eq.s32.totalorder %s41, 0
      %p362 = por %p360, %p361
      %s363 = ssub.s32 %s35, %s42
      %p364 = scmp.eq.s32.totalorder %s363, 0
      %s366 = sadd.s32 %s365, 1
      %s367 = scalar_select %p364, %s365, %s366
      %p370 = pneg %p364
      %p371 = scmp.eq.s32.totalorder %s35, 7
      %p372 = por %p370, %p371
      %p373 = scmp.ne.s32.totalorder %s365, %s368
      %p374 = scmp.eq.s32.totalorder %s35, 0
      %p375 = por %p373, %p374
      %p376 = scmp.ne.s32.totalorder %s365, %s368
      %p377 = scmp.eq.s32.totalorder %s40, 7
      %p378 = por %p376, %p377
      %p379 = scmp.ne.s32.totalorder %s368, %s369
      %p380 = scmp.eq.s32.totalorder %s40, 0
      %p381 = por %p379, %p380
      %p382 = scmp.ne.s32.totalorder %s368, %s369
      %p383 = scmp.eq.s32.totalorder %s41, 7
      %p384 = por %p382, %p383
      %p386 = scmp.ne.s32.totalorder %s369, %s385
      %p387 = scmp.eq.s32.totalorder %s41, 0
      %p388 = por %p386, %p387
      %s390 = sadd.s32 %s389, 1
      %p393 = scmp.eq.s32.totalorder %s35, 7
      %p394 = scmp.ne.s32.totalorder %s389, %s391
      %p395 = scmp.eq.s32.totalorder %s35, 0
      %p396 = por %p394, %p395
      %p397 = scmp.ne.s32.totalorder %s389, %s391
      %p398 = scmp.eq.s32.totalorder %s40, 7
      %p399 = por %p397, %p398
      %p400 = scmp.ne.s32.totalorder %s391, %s392
      %p401 = scmp.eq.s32.totalorder %s40, 0
      %p402 = por %p400, %p401
      %p403 = scmp.ne.s32.totalorder %s391, %s392
      %p404 = scmp.eq.s32.totalorder %s41, 7
      %p405 = por %p403, %p404
      %p407 = scmp.ne.s32.totalorder %s392, %s406
      %p408 = scmp.eq.s32.totalorder %s41, 0
      %p409 = por %p407, %p408
      %s411 = sadd.s32 %s410, 1
      %p414 = scmp.eq.s32.totalorder %s35, 7
      %p415 = scmp.ne.s32.totalorder %s410, %s412
      %p416 = scmp.eq.s32.totalorder %s35, 0
      %p417 = por %p415, %p416
      %p418 = scmp.ne.s32.totalorder %s410, %s412
      %p419 = scmp.eq.s32.totalorder %s40, 7
      %p420 = por %p418, %p419
      %p421 = scmp.ne.s32.totalorder %s412, %s413
      %p422 = scmp.eq.s32.totalorder %s40, 0
      %p423 = por %p421, %p422
      %p424 = scmp.ne.s32.totalorder %s412, %s413
      %p425 = scmp.eq.s32.totalorder %s41, 7
      %p426 = por %p424, %p425
      %p428 = scmp.ne.s32.totalorder %s413, %s427
      %p429 = scmp.eq.s32.totalorder %s41, 0
      %p430 = por %p428, %p429
      %p431 = scmp.le.s32.totalorder 1, %s35
      %p432 = scmp.lt.s32.totalorder %s35, 9
      %p433 = pnand %p431, %p432
      %p434 = pneg %p433
      // Predicated region
      $region9: #{memory_forward.1} parent=5 // pred_check
        _
      $region10: #{memory_forward.1} parent=5 // pred_check_branch
        %436 = sbr.rel (%p433) target = $region12
      $region11: #{memory_forward.1} parent=5 // pred_region
        %s437 = ssub.s32 %s35, 1
        // Predicated region
        $region13: #{memory_forward.1} parent=11 // pred_check
          %p438 = pneg %p56
        $region14: #{memory_forward.1} parent=11 // pred_check_branch
          %440 = sbr.rel (%p438) target = $region16
        $region15: #{memory_forward.1} parent=11 // pred_region
          %442 = vsyncadd [#allocation5], 0
          %s444 = sshll.u32 %s0, 4
          %s445 = int_to_ptr.vmem [resolvable:$true] %s444
          %447 = dma.vmem_to_smem %s445, 16, [#allocation2], [#allocation5]
        $region16: #{memory_forward.1} parent=11 // pred_fallthru
          _
        // Predicated region
        $region17: #{memory_forward.1} parent=11 // pred_check
          %p448 = pneg %p103
        $region18: #{memory_forward.1} parent=11 // pred_check_branch
          %450 = sbr.rel (%p448) target = $region20
        $region19: #{memory_forward.1} parent=11 // pred_region
          %452 = vsyncadd [#allocation3], 0
          %s454 = sshll.u32 %s2, 4
          %s455 = int_to_ptr.hbm [resolvable:$true] %s454
          %s456 = sshll.u32 [#allocation6], 4
          %s457 = int_to_ptr.vmem [resolvable:$true] %s456
          %459 = dma.hbm_to_vmem [thread:$0]  %s455, 16, %s457, [#allocation3]
        $region20: #{memory_forward.1} parent=11 // pred_fallthru
          _
        // Predicated region
        $region21: #{memory_forward.1} parent=11 // pred_check
          %p460 = pneg %p124
        $region22: #{memory_forward.1} parent=11 // pred_check_branch
          %462 = sbr.rel (%p460) target = $region24
        $region23: #{memory_forward.1} parent=11 // pred_region
          %464 = vsyncadd [#allocation8], 0
          %s466 = sshll.u32 %s3, 4
          %s467 = int_to_ptr.hbm [resolvable:$true] %s466
          %s468 = sshll.u32 [#allocation7], 4
          %s469 = int_to_ptr.vmem [resolvable:$true] %s468
          %471 = dma.hbm_to_vmem [thread:$0]  %s467, 16, %s469, [#allocation8]
        $region24: #{memory_forward.1} parent=11 // pred_fallthru
          _
        // Predicated region
        $region25: #{memory_forward.1} parent=11 // pred_check
          %p472 = pneg %p145
        $region26: #{memory_forward.1} parent=11 // pred_check_branch
          %474 = sbr.rel (%p472) target = $region28
        $region27: #{memory_forward.1} parent=11 // pred_region
          %476 = vsyncadd [#allocation8], 0
          %s477 = sshll.u32 %s4, 4
          %s478 = int_to_ptr.hbm [resolvable:$true] %s477
          %s479 = sshll.u32 [#allocation9], 4
          %s480 = int_to_ptr.vmem [resolvable:$true] %s479
          %485 = dma.hbm_to_vmem [thread:$0]  %s478, 8192, %s480, [#allocation8], 512, 512, 32
        $region28: #{memory_forward.1} parent=11 // pred_fallthru
          _
        // Predicated region
        $region29: #{memory_forward.1} parent=11 // pred_check
          %p486 = pneg %p166
        $region30: #{memory_forward.1} parent=11 // pred_check_branch
          %488 = sbr.rel (%p486) target = $region32
        $region31: #{memory_forward.1} parent=11 // pred_region
          %490 = vsyncadd [#allocation11], 0
          %s492 = sshll.u32 %s5, 4
          %s493 = int_to_ptr.hbm [resolvable:$true] %s492
          %s494 = sshll.u32 [#allocation10], 4
          %s495 = int_to_ptr.vmem [resolvable:$true] %s494
          %497 = dma.hbm_to_vmem [thread:$0]  %s493, 64, %s495, [#allocation11]
        $region32: #{memory_forward.1} parent=11 // pred_fallthru
          _
        // Predicated region
        $region33: #{memory_forward.1} parent=11 // pred_check
          %p498 = pneg %p187
        $region34: #{memory_forward.1} parent=11 // pred_check_branch
          %500 = sbr.rel (%p498) target = $region36
        $region35: #{memory_forward.1} parent=11 // pred_region
          %502 = vsyncadd [#allocation11], 0
          %s503 = sshll.u32 %s6, 4
          %s504 = int_to_ptr.hbm [resolvable:$true] %s503
          %s505 = sshll.u32 [#allocation12], 4
          %s506 = int_to_ptr.vmem [resolvable:$true] %s505
          %511 = dma.hbm_to_vmem [thread:$0]  %s504, 8192, %s506, [#allocation11], 512, 512, 32
        $region36: #{memory_forward.1} parent=11 // pred_fallthru
          _
        // Predicated region
        $region37: #{memory_forward.1} parent=11 // pred_check
          %p512 = pneg %p208
        $region38: #{memory_forward.1} parent=11 // pred_check_branch
          %514 = sbr.rel (%p512) target = $region40
        $region39: #{memory_forward.1} parent=11 // pred_region
          %516 = vsyncadd [#allocation14], 0
          %s517 = sshll.u32 %s7, 4
          %s518 = int_to_ptr.hbm [resolvable:$true] %s517
          %s519 = sshll.u32 [#allocation13], 4
          %s520 = int_to_ptr.vmem [resolvable:$true] %s519
          %525 = dma.hbm_to_vmem [thread:$0]  %s518, 8192, %s520, [#allocation14], 512, 512, 32
        $region40: #{memory_forward.1} parent=11 // pred_fallthru
          _
        // Predicated region
        $region41: #{memory_forward.1} parent=11 // pred_check
          %p526 = pneg %p229
        $region42: #{memory_forward.1} parent=11 // pred_check_branch
          %528 = sbr.rel (%p526) target = $region44
        $region43: #{memory_forward.1} parent=11 // pred_region
          %530 = vsyncadd [#allocation14], 0
          %s532 = sshll.u32 %s8, 4
          %s533 = int_to_ptr.hbm [resolvable:$true] %s532
          %s534 = sshll.u32 [#allocation15], 4
          %s535 = int_to_ptr.vmem [resolvable:$true] %s534
          %537 = dma.hbm_to_vmem [thread:$0]  %s533, 64, %s535, [#allocation14]
        $region44: #{memory_forward.1} parent=11 // pred_fallthru
          _
        // Predicated region
        $region45: #{memory_forward.1} parent=11 // pred_check
          %p538 = pneg %p250
        $region46: #{memory_forward.1} parent=11 // pred_check_branch
          %540 = sbr.rel (%p538) target = $region48
        $region47: #{memory_forward.1} parent=11 // pred_region
          %542 = vsyncadd [#allocation17], 0
          %s544 = sshll.u32 %s9, 4
          %s545 = int_to_ptr.hbm [resolvable:$true] %s544
          %s546 = sshll.u32 [#allocation16], 4
          %s547 = int_to_ptr.vmem [resolvable:$true] %s546
          %549 = dma.hbm_to_vmem [thread:$0]  %s545, 64, %s547, [#allocation17]
        $region48: #{memory_forward.1} parent=11 // pred_fallthru
          _
        // Predicated region
        $region49: #{memory_forward.1} parent=11 // pred_check
          %p550 = pneg %p271
        $region50: #{memory_forward.1} parent=11 // pred_check_branch
          %552 = sbr.rel (%p550) target = $region52
        $region51: #{memory_forward.1} parent=11 // pred_region
          %554 = vsyncadd [#allocation17], 0
          %s556 = sshll.u32 %s10, 4
          %s557 = int_to_ptr.hbm [resolvable:$true] %s556
          %s558 = sshll.u32 [#allocation18], 4
          %s559 = int_to_ptr.vmem [resolvable:$true] %s558
          %561 = dma.hbm_to_vmem [thread:$0]  %s557, 64, %s559, [#allocation17]
        $region52: #{memory_forward.1} parent=11 // pred_fallthru
          _
        // Predicated region
        $region53: #{memory_forward.1} parent=11 // pred_check
          %p562 = pneg %p292
        $region54: #{memory_forward.1} parent=11 // pred_check_branch
          %564 = sbr.rel (%p562) target = $region56
        $region55: #{memory_forward.1} parent=11 // pred_region
          %566 = vsyncadd [#allocation20], 0
          %s567 = sshll.u32 %s11, 4
          %s568 = int_to_ptr.hbm [resolvable:$true] %s567
          %s569 = sshll.u32 [#allocation19], 4
          %s570 = int_to_ptr.vmem [resolvable:$true] %s569
          %575 = dma.hbm_to_vmem [thread:$0]  %s568, 8192, %s570, [#allocation20], 128, 128, 8
        $region56: #{memory_forward.1} parent=11 // pred_fallthru
          _
        // Predicated region
        $region57: #{memory_forward.1} parent=11 // pred_check
          %p576 = pneg %p313
        $region58: #{memory_forward.1} parent=11 // pred_check_branch
          %578 = sbr.rel (%p576) target = $region60
        $region59: #{memory_forward.1} parent=11 // pred_region
          _
        $region60: #{memory_forward.1} parent=11 // pred_fallthru
          _
        // Predicated region
        $region61: #{memory_forward.1} parent=11 // pred_check
          %p579 = pneg %p334
        $region62: #{memory_forward.1} parent=11 // pred_check_branch
          %581 = sbr.rel (%p579) target = $region64
        $region63: #{memory_forward.1} parent=11 // pred_region
          _
        $region64: #{memory_forward.1} parent=11 // pred_fallthru
          _
        // Predicated region
        $region65: #{memory_forward.1} parent=11 // pred_check
          %p582 = pneg %p355
        $region66: #{memory_forward.1} parent=11 // pred_check_branch
          %584 = sbr.rel (%p582) target = $region68
        $region67: #{memory_forward.1} parent=11 // pred_region
          _
        $region68: #{memory_forward.1} parent=11 // pred_fallthru
          _
      $region12: #{memory_forward.1} parent=5 // pred_fallthru
        _
      %p585 = scmp.lt.s32.totalorder %s35, 8
      // Predicated region
      $region69: #{memory_forward.1} parent=5 // pred_check
        %p586 = pneg %p585
      $region70: #{memory_forward.1} parent=5 // pred_check_branch
        %588 = sbr.rel (%p586) target = $region72
      $region71: #{memory_forward.1} parent=5 // pred_region
        // Predicated region
        $region73: #{memory_forward.1} parent=71 // pred_check
          %p589 = pneg %p76
        $region74: #{memory_forward.1} parent=71 // pred_check_branch
          %591 = sbr.rel (%p589) target = $region76
        $region75: #{memory_forward.1} parent=71 // pred_region
          %p592 = scmp.lt.s32.totalorder %s35, 7
          %s593 = scalar_select %p592, %s35, 7
          %s594 = scalar_lea.vmem %s1, %s593
        $region76: #{memory_forward.1} parent=71 // pred_fallthru
          _
      $region72: #{memory_forward.1} parent=5 // pred_fallthru
        _
      %p595 = scmp.le.s32.totalorder 1, %s35
      %p596 = scmp.lt.s32.totalorder %s35, 9
      %p597 = pnand %p595, %p596
      %p598 = pneg %p597
      // Predicated region
      $region77: #{memory_forward.1} parent=5 // pred_check
        _
      $region78: #{memory_forward.1} parent=5 // pred_check_branch
        %600 = sbr.rel (%p597) target = $region80
      $region79: #{memory_forward.1} parent=5 // pred_region
        %s601 = ssub.s32 %s35, 1
        // Predicated region
        $region81: #{memory_forward.1} parent=79 // pred_check
          %p602 = pneg %p56
        $region82: #{memory_forward.1} parent=79 // pred_check_branch
          %604 = sbr.rel (%p602) target = $region84
        $region83: #{memory_forward.1} parent=79 // pred_region
          %606 = dma.done [#allocation5], 16
        $region84: #{memory_forward.1} parent=79 // pred_fallthru
          _
        // Predicated region
        $region85: #{memory_forward.1} parent=79 // pred_check
          %p607 = pneg %p103
        $region86: #{memory_forward.1} parent=79 // pred_check_branch
          %609 = sbr.rel (%p607) target = $region88
        $region87: #{memory_forward.1} parent=79 // pred_region
          %611 = dma.done [#allocation3], 16
        $region88: #{memory_forward.1} parent=79 // pred_fallthru
          _
        // Predicated region
        $region89: #{memory_forward.1} parent=79 // pred_check
          %p612 = pneg %p124
        $region90: #{memory_forward.1} parent=79 // pred_check_branch
          %614 = sbr.rel (%p612) target = $region92
        $region91: #{memory_forward.1} parent=79 // pred_region
          %616 = dma.done [#allocation8], 16
        $region92: #{memory_forward.1} parent=79 // pred_fallthru
          _
        // Predicated region
        $region93: #{memory_forward.1} parent=79 // pred_check
          %p617 = pneg %p145
        $region94: #{memory_forward.1} parent=79 // pred_check_branch
          %619 = sbr.rel (%p617) target = $region96
        $region95: #{memory_forward.1} parent=79 // pred_region
          %621 = dma.done [#allocation8], 8192
        $region96: #{memory_forward.1} parent=79 // pred_fallthru
          _
        // Predicated region
        $region97: #{memory_forward.1} parent=79 // pred_check
          %p622 = pneg %p166
        $region98: #{memory_forward.1} parent=79 // pred_check_branch
          %624 = sbr.rel (%p622) target = $region100
        $region99: #{memory_forward.1} parent=79 // pred_region
          %626 = dma.done [#allocation11], 64
        $region100: #{memory_forward.1} parent=79 // pred_fallthru
          _
        // Predicated region
        $region101: #{memory_forward.1} parent=79 // pred_check
          %p627 = pneg %p187
        $region102: #{memory_forward.1} parent=79 // pred_check_branch
          %629 = sbr.rel (%p627) target = $region104
        $region103: #{memory_forward.1} parent=79 // pred_region
          %631 = dma.done [#allocation11], 8192
        $region104: #{memory_forward.1} parent=79 // pred_fallthru
          _
        // Predicated region
        $region105: #{memory_forward.1} parent=79 // pred_check
          %p632 = pneg %p208
        $region106: #{memory_forward.1} parent=79 // pred_check_branch
          %634 = sbr.rel (%p632) target = $region108
        $region107: #{memory_forward.1} parent=79 // pred_region
          %636 = dma.done [#allocation14], 8192
        $region108: #{memory_forward.1} parent=79 // pred_fallthru
          _
        // Predicated region
        $region109: #{memory_forward.1} parent=79 // pred_check
          %p637 = pneg %p229
        $region110: #{memory_forward.1} parent=79 // pred_check_branch
          %639 = sbr.rel (%p637) target = $region112
        $region111: #{memory_forward.1} parent=79 // pred_region
          %641 = dma.done [#allocation14], 64
        $region112: #{memory_forward.1} parent=79 // pred_fallthru
          _
        // Predicated region
        $region113: #{memory_forward.1} parent=79 // pred_check
          %p642 = pneg %p250
        $region114: #{memory_forward.1} parent=79 // pred_check_branch
          %644 = sbr.rel (%p642) target = $region116
        $region115: #{memory_forward.1} parent=79 // pred_region
          %646 = dma.done [#allocation17], 64
        $region116: #{memory_forward.1} parent=79 // pred_fallthru
          _
        // Predicated region
        $region117: #{memory_forward.1} parent=79 // pred_check
          %p647 = pneg %p271
        $region118: #{memory_forward.1} parent=79 // pred_check_branch
          %649 = sbr.rel (%p647) target = $region120
        $region119: #{memory_forward.1} parent=79 // pred_region
          %651 = dma.done [#allocation17], 64
        $region120: #{memory_forward.1} parent=79 // pred_fallthru
          _
        // Predicated region
        $region121: #{memory_forward.1} parent=79 // pred_check
          %p652 = pneg %p292
        $region122: #{memory_forward.1} parent=79 // pred_check_branch
          %654 = sbr.rel (%p652) target = $region124
        $region123: #{memory_forward.1} parent=79 // pred_region
          %656 = dma.done [#allocation20], 8192
        $region124: #{memory_forward.1} parent=79 // pred_fallthru
          _
        %657 = sfence
        %p658 = pneg %p56
        %p659 = pneg %p53
        %p660 = scmp.lt.s32.totalorder %s40, 7
        %s661 = scalar_select %p660, %s40, 7
        %s662 = scalar_lea.vmem %s1, %s661
        %p663 = pneg %p82
        %p664 = pneg %p79
        %p665 = pneg %p103
        %p666 = pneg %p100
        %p667 = pneg %p124
        %p668 = pneg %p121
        %p669 = pneg %p145
        %p670 = pneg %p142
        %p671 = pneg %p166
        %p672 = pneg %p163
        %p673 = pneg %p187
        %p674 = pneg %p184
        %p675 = pneg %p208
        %p676 = pneg %p205
        %p677 = pneg %p229
        %p678 = pneg %p226
        %p679 = pneg %p250
        %p680 = pneg %p247
        %p681 = pneg %p271
        %p682 = pneg %p268
        %p683 = pneg %p292
        %p684 = pneg %p289
        %p685 = pneg %p313
        %p686 = pneg %p310
        %p687 = pneg %p334
        %p688 = pneg %p331
        %p689 = pneg %p355
        %p690 = pneg %p352
        %p691 = pneg %p381
        %p692 = pneg %p378
        %s693 = sand.u32 %s368, 1
        %s694 = scalar_lea.sflag [#allocation4], %s693
        %s695 = sand.u32 %s368, 1
        %s696 = scalar_lea.vmem [#allocation21], %s695
        %p697 = pneg %p402
        %p698 = pneg %p399
        %p699 = pneg %p423
        %p700 = pneg %p420
        %p701 = scmp.lt.s32.totalorder %s40, 7
        %s702 = scalar_select %p701, %s40, 7
        %s703 = scalar_lea.vmem %s1, %s702
        %p704 = scmp.eq.s32.totalorder %s40, 0
        // Predicated region
        $region125: #{memory_forward.1} parent=79 // pred_check
          %p705 = pneg %p704
        $region126: #{memory_forward.1} parent=79 // pred_check_branch
          %707 = sbr.rel (%p705) target = $region128
        $region127: #{memory_forward.1} parent=79 // pred_region
          %v708 = vld [vmem:[#allocation6] sm:$0x1]
          %709 = vst [vmem:[#allocation22] sm:$0x1] %v708
          %v710 = vld [vmem:[#allocation7] sm:$0x1]
          %711 = vst [vmem:[#allocation24] sm:$0x1] %v710
        $region128: #{memory_forward.1} parent=79 // pred_fallthru
          _
        %v712 = vld [vmem:[%s703] sm:$0x1]
        %v713 = vld [vmem:[#allocation22] sm:$0x1]
        %v714 = vld [vmem:[#allocation24] sm:$0x1]
        %s715 = sld [smem:[#allocation2]]
        %s716 = sld [smem:[#allocation2 + $0x1]]
        %v717 = vsub.f32 %v713, %v712
        %v718 = vstv %s715
        %v719 = vmul.f32 %v718, %v717
        %v720 = vadd.f32 %v712, %v719
        %v721 = vsub.f32 %v714, %v712
        %v722 = vstv %s716
        %v723 = vmul.f32 %v722, %v721
        %v724 = vadd.f32 %v712, %v723
        %v725 = vld [vmem:[#allocation9] sm:$0xff]
        %v726 = vld [vmem:[#allocation9 + $0x8] sm:$0xff]
        %v727 = vld [vmem:[#allocation9 + $0x10] sm:$0xff]
        %v728 = vld [vmem:[#allocation9 + $0x18] sm:$0xff]
        %v729 = vld [vmem:[#allocation9 + $0x20] sm:$0xff]
        %v730 = vld [vmem:[#allocation9 + $0x28] sm:$0xff]
        %v731 = vld [vmem:[#allocation9 + $0x30] sm:$0xff]
        %v732 = vld [vmem:[#allocation9 + $0x38] sm:$0xff]
        %v733 = vld [vmem:[#allocation9 + $0x40] sm:$0xff]
        %v734 = vld [vmem:[#allocation9 + $0x48] sm:$0xff]
        %v735 = vld [vmem:[#allocation9 + $0x50] sm:$0xff]
        %v736 = vld [vmem:[#allocation9 + $0x58] sm:$0xff]
        %v737 = vld [vmem:[#allocation9 + $0x60] sm:$0xff]
        %v738 = vld [vmem:[#allocation9 + $0x68] sm:$0xff]
        %v739 = vld [vmem:[#allocation9 + $0x70] sm:$0xff]
        %v740 = vld [vmem:[#allocation9 + $0x78] sm:$0xff]
        %v741 = vld [vmem:[#allocation9 + $0x80] sm:$0xff]
        %v742 = vld [vmem:[#allocation9 + $0x88] sm:$0xff]
        %v743 = vld [vmem:[#allocation9 + $0x90] sm:$0xff]
        %v744 = vld [vmem:[#allocation9 + $0x98] sm:$0xff]
        %v745 = vld [vmem:[#allocation9 + $0xa0] sm:$0xff]
        %v746 = vld [vmem:[#allocation9 + $0xa8] sm:$0xff]
        %v747 = vld [vmem:[#allocation9 + $0xb0] sm:$0xff]
        %v748 = vld [vmem:[#allocation9 + $0xb8] sm:$0xff]
        %v749 = vld [vmem:[#allocation9 + $0xc0] sm:$0xff]
        %v750 = vld [vmem:[#allocation9 + $0xc8] sm:$0xff]
        %v751 = vld [vmem:[#allocation9 + $0xd0] sm:$0xff]
        %v752 = vld [vmem:[#allocation9 + $0xd8] sm:$0xff]
        %v753 = vld [vmem:[#allocation9 + $0xe0] sm:$0xff]
        %v754 = vld [vmem:[#allocation9 + $0xe8] sm:$0xff]
        %v755 = vld [vmem:[#allocation9 + $0xf0] sm:$0xff]
        %v756 = vld [vmem:[#allocation9 + $0xf8] sm:$0xff]
        %v757 = vld [vmem:[#allocation9 + $0x100] sm:$0xff]
        %v758 = vld [vmem:[#allocation9 + $0x108] sm:$0xff]
        %v759 = vld [vmem:[#allocation9 + $0x110] sm:$0xff]
        %v760 = vld [vmem:[#allocation9 + $0x118] sm:$0xff]
        %v761 = vld [vmem:[#allocation9 + $0x120] sm:$0xff]
        %v762 = vld [vmem:[#allocation9 + $0x128] sm:$0xff]
        %v763 = vld [vmem:[#allocation9 + $0x130] sm:$0xff]
        %v764 = vld [vmem:[#allocation9 + $0x138] sm:$0xff]
        %v765 = vld [vmem:[#allocation9 + $0x140] sm:$0xff]
        %v766 = vld [vmem:[#allocation9 + $0x148] sm:$0xff]
        %v767 = vld [vmem:[#allocation9 + $0x150] sm:$0xff]
        %v768 = vld [vmem:[#allocation9 + $0x158] sm:$0xff]
        %v769 = vld [vmem:[#allocation9 + $0x160] sm:$0xff]
        %v770 = vld [vmem:[#allocation9 + $0x168] sm:$0xff]
        %v771 = vld [vmem:[#allocation9 + $0x170] sm:$0xff]
        %v772 = vld [vmem:[#allocation9 + $0x178] sm:$0xff]
        %v773 = vld [vmem:[#allocation9 + $0x180] sm:$0xff]
        %v774 = vld [vmem:[#allocation9 + $0x188] sm:$0xff]
        %v775 = vld [vmem:[#allocation9 + $0x190] sm:$0xff]
        %v776 = vld [vmem:[#allocation9 + $0x198] sm:$0xff]
        %v777 = vld [vmem:[#allocation9 + $0x1a0] sm:$0xff]
        %v778 = vld [vmem:[#allocation9 + $0x1a8] sm:$0xff]
        %v779 = vld [vmem:[#allocation9 + $0x1b0] sm:$0xff]
        %v780 = vld [vmem:[#allocation9 + $0x1b8] sm:$0xff]
        %v781 = vld [vmem:[#allocation9 + $0x1c0] sm:$0xff]
        %v782 = vld [vmem:[#allocation9 + $0x1c8] sm:$0xff]
        %v783 = vld [vmem:[#allocation9 + $0x1d0] sm:$0xff]
        %v784 = vld [vmem:[#allocation9 + $0x1d8] sm:$0xff]
        %v785 = vld [vmem:[#allocation9 + $0x1e0] sm:$0xff]
        %v786 = vld [vmem:[#allocation9 + $0x1e8] sm:$0xff]
        %v787 = vld [vmem:[#allocation9 + $0x1f0] sm:$0xff]
        %v788 = vld [vmem:[#allocation9 + $0x1f8] sm:$0xff]
        %v789 = vld [vmem:[#allocation10] sm:$0xf]
        %v791 = vperm.slane %v789, 0
        %v792 = vperm.slane %v789, 1
        %v793 = vperm.slane %v789, 2
        %v794 = vperm.slane %v789, 3
        %799 = vmatpush.msra.mxu0 %v785
        %800 = vmatpush.msra.mxu0 %v781
        %801 = vmatpush.msra.mxu0 %v777
        %802 = vmatpush.msra.mxu0 %v773
        %803 = vmatpush.msra.mxu0 %v769
        %804 = vmatpush.msra.mxu0 %v765
        %805 = vmatpush.msra.mxu0 %v761
        %806 = vmatpush.msra.mxu0 %v757
        %807 = vmatpush.msra.mxu0 %v753
        %808 = vmatpush.msra.mxu0 %v749
        %809 = vmatpush.msra.mxu0 %v745
        %810 = vmatpush.msra.mxu0 %v741
        %811 = vmatpush.msra.mxu0 %v737
        %812 = vmatpush.msra.mxu0 %v733
        %813 = vmatpush.msra.mxu0 %v729
        %814 = vmatpush.msra.mxu0 %v725
        %815 = vmatmul.f32.gmra.mxu0 %v712
        %v816 = vpop.f32.mrf.mxu0
        %v817 = vadd.f32 %v791, %v816
        %818 = vdwg.mxu0
        %819 = vmatpush.msra.mxu0 %v786
        %820 = vmatpush.msra.mxu0 %v782
        %821 = vmatpush.msra.mxu0 %v778
        %822 = vmatpush.msra.mxu0 %v774
        %823 = vmatpush.msra.mxu0 %v770
        %824 = vmatpush.msra.mxu0 %v766
        %825 = vmatpush.msra.mxu0 %v762
        %826 = vmatpush.msra.mxu0 %v758
        %827 = vmatpush.msra.mxu0 %v754
        %828 = vmatpush.msra.mxu0 %v750
        %829 = vmatpush.msra.mxu0 %v746
        %830 = vmatpush.msra.mxu0 %v742
        %831 = vmatpush.msra.mxu0 %v738
        %832 = vmatpush.msra.mxu0 %v734
        %833 = vmatpush.msra.mxu0 %v730
        %834 = vmatpush.msra.mxu0 %v726
        %835 = vmatmul.f32.gmra.mxu0 %v712
        %v836 = vpop.f32.mrf.mxu0
        %v837 = vadd.f32 %v792, %v836
        %838 = vdwg.mxu0
        %839 = vmatpush.msra.mxu0 %v787
        %840 = vmatpush.msra.mxu0 %v783
        %841 = vmatpush.msra.mxu0 %v779
        %842 = vmatpush.msra.mxu0 %v775
        %843 = vmatpush.msra.mxu0 %v771
        %844 = vmatpush.msra.mxu0 %v767
        %845 = vmatpush.msra.mxu0 %v763
        %846 = vmatpush.msra.mxu0 %v759
        %847 = vmatpush.msra.mxu0 %v755
        %848 = vmatpush.msra.mxu0 %v751
        %849 = vmatpush.msra.mxu0 %v747
        %850 = vmatpush.msra.mxu0 %v743
        %851 = vmatpush.msra.mxu0 %v739
        %852 = vmatpush.msra.mxu0 %v735
        %853 = vmatpush.msra.mxu0 %v731
        %854 = vmatpush.msra.mxu0 %v727
        %855 = vmatmul.f32.gmra.mxu0 %v712
        %v856 = vpop.f32.mrf.mxu0
        %v857 = vadd.f32 %v793, %v856
        %858 = vdwg.mxu0
        %859 = vmatpush.msra.mxu0 %v788
        %860 = vmatpush.msra.mxu0 %v784
        %861 = vmatpush.msra.mxu0 %v780
        %862 = vmatpush.msra.mxu0 %v776
        %863 = vmatpush.msra.mxu0 %v772
        %864 = vmatpush.msra.mxu0 %v768
        %865 = vmatpush.msra.mxu0 %v764
        %866 = vmatpush.msra.mxu0 %v760
        %867 = vmatpush.msra.mxu0 %v756
        %868 = vmatpush.msra.mxu0 %v752
        %869 = vmatpush.msra.mxu0 %v748
        %870 = vmatpush.msra.mxu0 %v744
        %871 = vmatpush.msra.mxu0 %v740
        %872 = vmatpush.msra.mxu0 %v736
        %873 = vmatpush.msra.mxu0 %v732
        %874 = vmatpush.msra.mxu0 %v728
        %875 = vmatmul.f32.gmra.mxu0 %v712
        %v876 = vpop.f32.mrf.mxu0
        %v877 = vadd.f32 %v794, %v876
        %878 = vdwg.mxu0
        %v879 = vmax.f32 %v817, -30.0
        %v880 = vmin.f32 %v879, 30.0
        %v881 = vmax.f32 %v837, -30.0
        %v882 = vmin.f32 %v881, 30.0
        %v883 = vmax.f32 %v857, -30.0
        %v884 = vmin.f32 %v883, 30.0
        %v885 = vmax.f32 %v877, -30.0
        %v886 = vmin.f32 %v885, 30.0
        %v887 = vmax.f32 %v880, %v882
        %v888 = vmax.f32 %v884, %v886
        %v889 = vmax.f32 %v887, %v888
        %v890 = vsub.f32 %v880, %v889
        %v891 = vmul.f32 %v890, 1.442695
        %v892 = vpow.pop %v891
        %v893 = vsub.f32 %v882, %v889
        %v894 = vmul.f32 %v893, 1.442695
        %v895 = vpow.pop %v894
        %v896 = vsub.f32 %v884, %v889
        %v897 = vmul.f32 %v896, 1.442695
        %v898 = vpow.pop %v897
        %v899 = vsub.f32 %v886, %v889
        %v900 = vmul.f32 %v899, 1.442695
        %v901 = vpow.pop %v900
        %v902 = vadd.f32 %v892, %v895
        %v903 = vadd.f32 %v902, %v898
        %v904 = vadd.f32 %v903, %v901
        %v905 = vrcp.pop %v904
        %v906 = vmul.f32 %v904, %v905
        %v907 = vsub.f32 2.0, %v906
        %v908 = vmul.f32 %v905, %v907
        %v909 = vmul.f32 %v892, %v908
        %v910 = vmul.f32 %v895, %v908
        %v911 = vmul.f32 %v898, %v908
        %v912 = vmul.f32 %v901, %v908
        %v913 = vmul.f32 %v909, %v720
        %v914 = vmul.f32 %v910, %v724
        %v915 = vadd.f32 %v913, %v914
        %v916 = vmul.f32 %v911, %v712
        %v917 = vadd.f32 %v915, %v916
        %v918 = vld [vmem:[#allocation12] sm:$0xff]
        %v919 = vld [vmem:[#allocation12 + $0x8] sm:$0xff]
        %v920 = vld [vmem:[#allocation12 + $0x10] sm:$0xff]
        %v921 = vld [vmem:[#allocation12 + $0x18] sm:$0xff]
        %v922 = vld [vmem:[#allocation12 + $0x20] sm:$0xff]
        %v923 = vld [vmem:[#allocation12 + $0x28] sm:$0xff]
        %v924 = vld [vmem:[#allocation12 + $0x30] sm:$0xff]
        %v925 = vld [vmem:[#allocation12 + $0x38] sm:$0xff]
        %v926 = vld [vmem:[#allocation12 + $0x40] sm:$0xff]
        %v927 = vld [vmem:[#allocation12 + $0x48] sm:$0xff]
        %v928 = vld [vmem:[#allocation12 + $0x50] sm:$0xff]
        %v929 = vld [vmem:[#allocation12 + $0x58] sm:$0xff]
        %v930 = vld [vmem:[#allocation12 + $0x60] sm:$0xff]
        %v931 = vld [vmem:[#allocation12 + $0x68] sm:$0xff]
        %v932 = vld [vmem:[#allocation12 + $0x70] sm:$0xff]
        %v933 = vld [vmem:[#allocation12 + $0x78] sm:$0xff]
        %v934 = vld [vmem:[#allocation12 + $0x80] sm:$0xff]
        %v935 = vld [vmem:[#allocation12 + $0x88] sm:$0xff]
        %v936 = vld [vmem:[#allocation12 + $0x90] sm:$0xff]
        %v937 = vld [vmem:[#allocation12 + $0x98] sm:$0xff]
        %v938 = vld [vmem:[#allocation12 + $0xa0] sm:$0xff]
        %v939 = vld [vmem:[#allocation12 + $0xa8] sm:$0xff]
        %v940 = vld [vmem:[#allocation12 + $0xb0] sm:$0xff]
        %v941 = vld [vmem:[#allocation12 + $0xb8] sm:$0xff]
        %v942 = vld [vmem:[#allocation12 + $0xc0] sm:$0xff]
        %v943 = vld [vmem:[#allocation12 + $0xc8] sm:$0xff]
        %v944 = vld [vmem:[#allocation12 + $0xd0] sm:$0xff]
        %v945 = vld [vmem:[#allocation12 + $0xd8] sm:$0xff]
        %v946 = vld [vmem:[#allocation12 + $0xe0] sm:$0xff]
        %v947 = vld [vmem:[#allocation12 + $0xe8] sm:$0xff]
        %v948 = vld [vmem:[#allocation12 + $0xf0] sm:$0xff]
        %v949 = vld [vmem:[#allocation12 + $0xf8] sm:$0xff]
        %v950 = vld [vmem:[#allocation12 + $0x100] sm:$0xff]
        %v951 = vld [vmem:[#allocation12 + $0x108] sm:$0xff]
        %v952 = vld [vmem:[#allocation12 + $0x110] sm:$0xff]
        %v953 = vld [vmem:[#allocation12 + $0x118] sm:$0xff]
        %v954 = vld [vmem:[#allocation12 + $0x120] sm:$0xff]
        %v955 = vld [vmem:[#allocation12 + $0x128] sm:$0xff]
        %v956 = vld [vmem:[#allocation12 + $0x130] sm:$0xff]
        %v957 = vld [vmem:[#allocation12 + $0x138] sm:$0xff]
        %v958 = vld [vmem:[#allocation12 + $0x140] sm:$0xff]
        %v959 = vld [vmem:[#allocation12 + $0x148] sm:$0xff]
        %v960 = vld [vmem:[#allocation12 + $0x150] sm:$0xff]
        %v961 = vld [vmem:[#allocation12 + $0x158] sm:$0xff]
        %v962 = vld [vmem:[#allocation12 + $0x160] sm:$0xff]
        %v963 = vld [vmem:[#allocation12 + $0x168] sm:$0xff]
        %v964 = vld [vmem:[#allocation12 + $0x170] sm:$0xff]
        %v965 = vld [vmem:[#allocation12 + $0x178] sm:$0xff]
        %v966 = vld [vmem:[#allocation12 + $0x180] sm:$0xff]
        %v967 = vld [vmem:[#allocation12 + $0x188] sm:$0xff]
        %v968 = vld [vmem:[#allocation12 + $0x190] sm:$0xff]
        %v969 = vld [vmem:[#allocation12 + $0x198] sm:$0xff]
        %v970 = vld [vmem:[#allocation12 + $0x1a0] sm:$0xff]
        %v971 = vld [vmem:[#allocation12 + $0x1a8] sm:$0xff]
        %v972 = vld [vmem:[#allocation12 + $0x1b0] sm:$0xff]
        %v973 = vld [vmem:[#allocation12 + $0x1b8] sm:$0xff]
        %v974 = vld [vmem:[#allocation12 + $0x1c0] sm:$0xff]
        %v975 = vld [vmem:[#allocation12 + $0x1c8] sm:$0xff]
        %v976 = vld [vmem:[#allocation12 + $0x1d0] sm:$0xff]
        %v977 = vld [vmem:[#allocation12 + $0x1d8] sm:$0xff]
        %v978 = vld [vmem:[#allocation12 + $0x1e0] sm:$0xff]
        %v979 = vld [vmem:[#allocation12 + $0x1e8] sm:$0xff]
        %v980 = vld [vmem:[#allocation12 + $0x1f0] sm:$0xff]
        %v981 = vld [vmem:[#allocation12 + $0x1f8] sm:$0xff]
        %v982 = vld [vmem:[#allocation13] sm:$0xff]
        %v983 = vld [vmem:[#allocation13 + $0x8] sm:$0xff]
        %v984 = vld [vmem:[#allocation13 + $0x10] sm:$0xff]
        %v985 = vld [vmem:[#allocation13 + $0x18] sm:$0xff]
        %v986 = vld [vmem:[#allocation13 + $0x20] sm:$0xff]
        %v987 = vld [vmem:[#allocation13 + $0x28] sm:$0xff]
        %v988 = vld [vmem:[#allocation13 + $0x30] sm:$0xff]
        %v989 = vld [vmem:[#allocation13 + $0x38] sm:$0xff]
        %v990 = vld [vmem:[#allocation13 + $0x40] sm:$0xff]
        %v991 = vld [vmem:[#allocation13 + $0x48] sm:$0xff]
        %v992 = vld [vmem:[#allocation13 + $0x50] sm:$0xff]
        %v993 = vld [vmem:[#allocation13 + $0x58] sm:$0xff]
        %v994 = vld [vmem:[#allocation13 + $0x60] sm:$0xff]
        %v995 = vld [vmem:[#allocation13 + $0x68] sm:$0xff]
        %v996 = vld [vmem:[#allocation13 + $0x70] sm:$0xff]
        %v997 = vld [vmem:[#allocation13 + $0x78] sm:$0xff]
        %v998 = vld [vmem:[#allocation13 + $0x80] sm:$0xff]
        %v999 = vld [vmem:[#allocation13 + $0x88] sm:$0xff]
        %v1000 = vld [vmem:[#allocation13 + $0x90] sm:$0xff]
        %v1001 = vld [vmem:[#allocation13 + $0x98] sm:$0xff]
        %v1002 = vld [vmem:[#allocation13 + $0xa0] sm:$0xff]
        %v1003 = vld [vmem:[#allocation13 + $0xa8] sm:$0xff]
        %v1004 = vld [vmem:[#allocation13 + $0xb0] sm:$0xff]
        %v1005 = vld [vmem:[#allocation13 + $0xb8] sm:$0xff]
        %v1006 = vld [vmem:[#allocation13 + $0xc0] sm:$0xff]
        %v1007 = vld [vmem:[#allocation13 + $0xc8] sm:$0xff]
        %v1008 = vld [vmem:[#allocation13 + $0xd0] sm:$0xff]
        %v1009 = vld [vmem:[#allocation13 + $0xd8] sm:$0xff]
        %v1010 = vld [vmem:[#allocation13 + $0xe0] sm:$0xff]
        %v1011 = vld [vmem:[#allocation13 + $0xe8] sm:$0xff]
        %v1012 = vld [vmem:[#allocation13 + $0xf0] sm:$0xff]
        %v1013 = vld [vmem:[#allocation13 + $0xf8] sm:$0xff]
        %v1014 = vld [vmem:[#allocation13 + $0x100] sm:$0xff]
        %v1015 = vld [vmem:[#allocation13 + $0x108] sm:$0xff]
        %v1016 = vld [vmem:[#allocation13 + $0x110] sm:$0xff]
        %v1017 = vld [vmem:[#allocation13 + $0x118] sm:$0xff]
        %v1018 = vld [vmem:[#allocation13 + $0x120] sm:$0xff]
        %v1019 = vld [vmem:[#allocation13 + $0x128] sm:$0xff]
        %v1020 = vld [vmem:[#allocation13 + $0x130] sm:$0xff]
        %v1021 = vld [vmem:[#allocation13 + $0x138] sm:$0xff]
        %v1022 = vld [vmem:[#allocation13 + $0x140] sm:$0xff]
        %v1023 = vld [vmem:[#allocation13 + $0x148] sm:$0xff]
        %v1024 = vld [vmem:[#allocation13 + $0x150] sm:$0xff]
        %v1025 = vld [vmem:[#allocation13 + $0x158] sm:$0xff]
        %v1026 = vld [vmem:[#allocation13 + $0x160] sm:$0xff]
        %v1027 = vld [vmem:[#allocation13 + $0x168] sm:$0xff]
        %v1028 = vld [vmem:[#allocation13 + $0x170] sm:$0xff]
        %v1029 = vld [vmem:[#allocation13 + $0x178] sm:$0xff]
        %v1030 = vld [vmem:[#allocation13 + $0x180] sm:$0xff]
        %v1031 = vld [vmem:[#allocation13 + $0x188] sm:$0xff]
        %v1032 = vld [vmem:[#allocation13 + $0x190] sm:$0xff]
        %v1033 = vld [vmem:[#allocation13 + $0x198] sm:$0xff]
        %v1034 = vld [vmem:[#allocation13 + $0x1a0] sm:$0xff]
        %v1035 = vld [vmem:[#allocation13 + $0x1a8] sm:$0xff]
        %v1036 = vld [vmem:[#allocation13 + $0x1b0] sm:$0xff]
        %v1037 = vld [vmem:[#allocation13 + $0x1b8] sm:$0xff]
        %v1038 = vld [vmem:[#allocation13 + $0x1c0] sm:$0xff]
        %v1039 = vld [vmem:[#allocation13 + $0x1c8] sm:$0xff]
        %v1040 = vld [vmem:[#allocation13 + $0x1d0] sm:$0xff]
        %v1041 = vld [vmem:[#allocation13 + $0x1d8] sm:$0xff]
        %v1042 = vld [vmem:[#allocation13 + $0x1e0] sm:$0xff]
        %v1043 = vld [vmem:[#allocation13 + $0x1e8] sm:$0xff]
        %v1044 = vld [vmem:[#allocation13 + $0x1f0] sm:$0xff]
        %v1045 = vld [vmem:[#allocation13 + $0x1f8] sm:$0xff]
        %1046 = vmatpush.msra.mxu0 %v1042
        %1047 = vmatpush.msra.mxu0 %v1038
        %1048 = vmatpush.msra.mxu0 %v1034
        %1049 = vmatpush.msra.mxu0 %v1030
        %1050 = vmatpush.msra.mxu0 %v1026
        %1051 = vmatpush.msra.mxu0 %v1022
        %1052 = vmatpush.msra.mxu0 %v1018
        %1053 = vmatpush.msra.mxu0 %v1014
        %1054 = vmatpush.msra.mxu0 %v1010
        %1055 = vmatpush.msra.mxu0 %v1006
        %1056 = vmatpush.msra.mxu0 %v1002
        %1057 = vmatpush.msra.mxu0 %v998
        %1058 = vmatpush.msra.mxu0 %v994
        %1059 = vmatpush.msra.mxu0 %v990
        %1060 = vmatpush.msra.mxu0 %v986
        %1061 = vmatpush.msra.mxu0 %v982
        %1062 = vmatmul.f32.gmra.mxu0 %v917
        %v1063 = vpop.f32.mrf.mxu0
        %v1064 = vadd.f32 0.0, %v1063
        %1065 = vdwg.mxu0
        %1066 = vmatpush.msra.mxu0 %v1043
        %1067 = vmatpush.msra.mxu0 %v1039
        %1068 = vmatpush.msra.mxu0 %v1035
        %1069 = vmatpush.msra.mxu0 %v1031
        %1070 = vmatpush.msra.mxu0 %v1027
        %1071 = vmatpush.msra.mxu0 %v1023
        %1072 = vmatpush.msra.mxu0 %v1019
        %1073 = vmatpush.msra.mxu0 %v1015
        %1074 = vmatpush.msra.mxu0 %v1011
        %1075 = vmatpush.msra.mxu0 %v1007
        %1076 = vmatpush.msra.mxu0 %v1003
        %1077 = vmatpush.msra.mxu0 %v999
        %1078 = vmatpush.msra.mxu0 %v995
        %1079 = vmatpush.msra.mxu0 %v991
        %1080 = vmatpush.msra.mxu0 %v987
        %1081 = vmatpush.msra.mxu0 %v983
        %1082 = vmatmul.f32.gmra.mxu0 %v917
        %v1083 = vpop.f32.mrf.mxu0
        %v1084 = vadd.f32 0.0, %v1083
        %1085 = vdwg.mxu0
        %1086 = vmatpush.msra.mxu0 %v1044
        %1087 = vmatpush.msra.mxu0 %v1040
        %1088 = vmatpush.msra.mxu0 %v1036
        %1089 = vmatpush.msra.mxu0 %v1032
        %1090 = vmatpush.msra.mxu0 %v1028
        %1091 = vmatpush.msra.mxu0 %v1024
        %1092 = vmatpush.msra.mxu0 %v1020
        %1093 = vmatpush.msra.mxu0 %v1016
        %1094 = vmatpush.msra.mxu0 %v1012
        %1095 = vmatpush.msra.mxu0 %v1008
        %1096 = vmatpush.msra.mxu0 %v1004
        %1097 = vmatpush.msra.mxu0 %v1000
        %1098 = vmatpush.msra.mxu0 %v996
        %1099 = vmatpush.msra.mxu0 %v992
        %1100 = vmatpush.msra.mxu0 %v988
        %1101 = vmatpush.msra.mxu0 %v984
        %1102 = vmatmul.f32.gmra.mxu0 %v917
        %v1103 = vpop.f32.mrf.mxu0
        %v1104 = vadd.f32 0.0, %v1103
        %1105 = vdwg.mxu0
        %1106 = vmatpush.msra.mxu0 %v1045
        %1107 = vmatpush.msra.mxu0 %v1041
        %1108 = vmatpush.msra.mxu0 %v1037
        %1109 = vmatpush.msra.mxu0 %v1033
        %1110 = vmatpush.msra.mxu0 %v1029
        %1111 = vmatpush.msra.mxu0 %v1025
        %1112 = vmatpush.msra.mxu0 %v1021
        %1113 = vmatpush.msra.mxu0 %v1017
        %1114 = vmatpush.msra.mxu0 %v1013
        %1115 = vmatpush.msra.mxu0 %v1009
        %1116 = vmatpush.msra.mxu0 %v1005
        %1117 = vmatpush.msra.mxu0 %v1001
        %1118 = vmatpush.msra.mxu0 %v997
        %1119 = vmatpush.msra.mxu0 %v993
        %1120 = vmatpush.msra.mxu0 %v989
        %1121 = vmatpush.msra.mxu0 %v985
        %1122 = vmatmul.f32.gmra.mxu0 %v917
        %v1123 = vpop.f32.mrf.mxu0
        %v1124 = vadd.f32 0.0, %v1123
        %1125 = vdwg.mxu0
        %1126 = vmatpush.msra.mxu0 %v978
        %1127 = vmatpush.msra.mxu0 %v974
        %1128 = vmatpush.msra.mxu0 %v970
        %1129 = vmatpush.msra.mxu0 %v966
        %1130 = vmatpush.msra.mxu0 %v962
        %1131 = vmatpush.msra.mxu0 %v958
        %1132 = vmatpush.msra.mxu0 %v954
        %1133 = vmatpush.msra.mxu0 %v950
        %1134 = vmatpush.msra.mxu0 %v946
        %1135 = vmatpush.msra.mxu0 %v942
        %1136 = vmatpush.msra.mxu0 %v938
        %1137 = vmatpush.msra.mxu0 %v934
        %1138 = vmatpush.msra.mxu0 %v930
        %1139 = vmatpush.msra.mxu0 %v926
        %1140 = vmatpush.msra.mxu0 %v922
        %1141 = vmatpush.msra.mxu0 %v918
        %1142 = vmatmul.f32.gmra.mxu0 %v712
        %v1143 = vpop.f32.mrf.mxu0
        %v1144 = vadd.f32 %v1064, %v1143
        %1145 = vdwg.mxu0
        %1146 = vmatpush.msra.mxu0 %v979
        %1147 = vmatpush.msra.mxu0 %v975
        %1148 = vmatpush.msra.mxu0 %v971
        %1149 = vmatpush.msra.mxu0 %v967
        %1150 = vmatpush.msra.mxu0 %v963
        %1151 = vmatpush.msra.mxu0 %v959
        %1152 = vmatpush.msra.mxu0 %v955
        %1153 = vmatpush.msra.mxu0 %v951
        %1154 = vmatpush.msra.mxu0 %v947
        %1155 = vmatpush.msra.mxu0 %v943
        %1156 = vmatpush.msra.mxu0 %v939
        %1157 = vmatpush.msra.mxu0 %v935
        %1158 = vmatpush.msra.mxu0 %v931
        %1159 = vmatpush.msra.mxu0 %v927
        %1160 = vmatpush.msra.mxu0 %v923
        %1161 = vmatpush.msra.mxu0 %v919
        %1162 = vmatmul.f32.gmra.mxu0 %v712
        %v1163 = vpop.f32.mrf.mxu0
        %v1164 = vadd.f32 %v1084, %v1163
        %1165 = vdwg.mxu0
        %1166 = vmatpush.msra.mxu0 %v980
        %1167 = vmatpush.msra.mxu0 %v976
        %1168 = vmatpush.msra.mxu0 %v972
        %1169 = vmatpush.msra.mxu0 %v968
        %1170 = vmatpush.msra.mxu0 %v964
        %1171 = vmatpush.msra.mxu0 %v960
        %1172 = vmatpush.msra.mxu0 %v956
        %1173 = vmatpush.msra.mxu0 %v952
        %1174 = vmatpush.msra.mxu0 %v948
        %1175 = vmatpush.msra.mxu0 %v944
        %1176 = vmatpush.msra.mxu0 %v940
        %1177 = vmatpush.msra.mxu0 %v936
        %1178 = vmatpush.msra.mxu0 %v932
        %1179 = vmatpush.msra.mxu0 %v928
        %1180 = vmatpush.msra.mxu0 %v924
        %1181 = vmatpush.msra.mxu0 %v920
        %1182 = vmatmul.f32.gmra.mxu0 %v712
        %v1183 = vpop.f32.mrf.mxu0
        %v1184 = vadd.f32 %v1104, %v1183
        %1185 = vdwg.mxu0
        %1186 = vmatpush.msra.mxu0 %v981
        %1187 = vmatpush.msra.mxu0 %v977
        %1188 = vmatpush.msra.mxu0 %v973
        %1189 = vmatpush.msra.mxu0 %v969
        %1190 = vmatpush.msra.mxu0 %v965
        %1191 = vmatpush.msra.mxu0 %v961
        %1192 = vmatpush.msra.mxu0 %v957
        %1193 = vmatpush.msra.mxu0 %v953
        %1194 = vmatpush.msra.mxu0 %v949
        %1195 = vmatpush.msra.mxu0 %v945
        %1196 = vmatpush.msra.mxu0 %v941
        %1197 = vmatpush.msra.mxu0 %v937
        %1198 = vmatpush.msra.mxu0 %v933
        %1199 = vmatpush.msra.mxu0 %v929
        %1200 = vmatpush.msra.mxu0 %v925
        %1201 = vmatpush.msra.mxu0 %v921
        %1202 = vmatmul.f32.gmra.mxu0 %v712
        %v1203 = vpop.f32.mrf.mxu0
        %v1204 = vadd.f32 %v1124, %v1203
        %1205 = vdwg.mxu0
        %v1206 = vld [vmem:[#allocation15] sm:$0xf]
        %v1208 = vperm.slane %v1206, 0
        %v1209 = vperm.slane %v1206, 1
        %v1210 = vperm.slane %v1206, 2
        %v1211 = vperm.slane %v1206, 3
        %v1216 = vadd.f32 %v1144, %v1208
        %v1217 = vadd.f32 %v1164, %v1209
        %v1218 = vadd.f32 %v1184, %v1210
        %v1219 = vadd.f32 %v1204, %v1211
        %v1220 = vmul.f32 %v1216, 0.5
        %v1221 = vmul.f32 %v1217, 0.5
        %v1222 = vmul.f32 %v1218, 0.5
        %v1223 = vmul.f32 %v1219, 0.5
        %v1224 = vmul.f32 %v1216, 0.70710677
        %v1225 = vmul.f32 %v1217, 0.70710677
        %v1226 = vmul.f32 %v1218, 0.70710677
        %v1227 = vmul.f32 %v1219, 0.70710677
        %vm1228 = vcmp.ge.f32.partialorder %v1224, 0.0
        %vm1229 = vcmp.ge.f32.partialorder %v1225, 0.0
        %vm1230 = vcmp.ge.f32.partialorder %v1226, 0.0
        %vm1231 = vcmp.ge.f32.partialorder %v1227, 0.0
        %v1232 = vsel %vm1228, 1.0, -1.0
        %v1233 = vsel %vm1229, 1.0, -1.0
        %v1234 = vsel %vm1230, 1.0, -1.0
        %v1235 = vsel %vm1231, 1.0, -1.0
        %v1236 = vand.u32 2147483647, %v1224
        %v1237 = vand.u32 2147483647, %v1225
        %v1238 = vand.u32 2147483647, %v1226
        %v1239 = vand.u32 2147483647, %v1227
        %v1240 = vmul.f32 %v1236, 0.3275911
        %v1241 = vmul.f32 %v1237, 0.3275911
        %v1242 = vmul.f32 %v1238, 0.3275911
        %v1243 = vmul.f32 %v1239, 0.3275911
        %v1244 = vadd.f32 %v1240, 1.0
        %v1245 = vadd.f32 %v1241, 1.0
        %v1246 = vadd.f32 %v1242, 1.0
        %v1247 = vadd.f32 %v1243, 1.0
        %v1248 = vrcp.pop %v1244
        %v1249 = vrcp.pop %v1245
        %v1250 = vrcp.pop %v1246
        %v1251 = vrcp.pop %v1247
        %v1252 = vmul.f32 %v1244, %v1248
        %v1253 = vmul.f32 %v1245, %v1249
        %v1254 = vmul.f32 %v1246, %v1250
        %v1255 = vmul.f32 %v1247, %v1251
        %v1256 = vsub.f32 2.0, %v1252
        %v1257 = vsub.f32 2.0, %v1253
        %v1258 = vsub.f32 2.0, %v1254
        %v1259 = vsub.f32 2.0, %v1255
        %v1260 = vmul.f32 %v1248, %v1256
        %v1261 = vmul.f32 %v1249, %v1257
        %v1262 = vmul.f32 %v1250, %v1258
        %v1263 = vmul.f32 %v1251, %v1259
        %v1264 = vmul.f32 %v1260, 1.0614054
        %v1265 = vmul.f32 %v1261, 1.0614054
        %v1266 = vmul.f32 %v1262, 1.0614054
        %v1267 = vmul.f32 %v1263, 1.0614054
        %v1268 = vadd.f32 %v1264, -1.4531521
        %v1269 = vadd.f32 %v1265, -1.4531521
        %v1270 = vadd.f32 %v1266, -1.4531521
        %v1271 = vadd.f32 %v1267, -1.4531521
        %v1272 = vmul.f32 %v1268, %v1260
        %v1273 = vmul.f32 %v1269, %v1261
        %v1274 = vmul.f32 %v1270, %v1262
        %v1275 = vmul.f32 %v1271, %v1263
        %v1276 = vadd.f32 %v1272, 1.4214138
        %v1277 = vadd.f32 %v1273, 1.4214138
        %v1278 = vadd.f32 %v1274, 1.4214138
        %v1279 = vadd.f32 %v1275, 1.4214138
        %v1280 = vmul.f32 %v1276, %v1260
        %v1281 = vmul.f32 %v1277, %v1261
        %v1282 = vmul.f32 %v1278, %v1262
        %v1283 = vmul.f32 %v1279, %v1263
        %v1284 = vadd.f32 %v1280, -0.28449672
        %v1285 = vadd.f32 %v1281, -0.28449672
        %v1286 = vadd.f32 %v1282, -0.28449672
        %v1287 = vadd.f32 %v1283, -0.28449672
        %v1288 = vmul.f32 %v1284, %v1260
        %v1289 = vmul.f32 %v1285, %v1261
        %v1290 = vmul.f32 %v1286, %v1262
        %v1291 = vmul.f32 %v1287, %v1263
        %v1292 = vadd.f32 %v1288, 0.2548296
        %v1293 = vadd.f32 %v1289, 0.2548296
        %v1294 = vadd.f32 %v1290, 0.2548296
        %v1295 = vadd.f32 %v1291, 0.2548296
        %v1296 = vmul.f32 %v1292, %v1260
        %v1297 = vmul.f32 %v1293, %v1261
        %v1298 = vmul.f32 %v1294, %v1262
        %v1299 = vmul.f32 %v1295, %v1263
        %v1300 = vsub.f32 0.0, %v1236
        %v1301 = vsub.f32 0.0, %v1237
        %v1302 = vsub.f32 0.0, %v1238
        %v1303 = vsub.f32 0.0, %v1239
        %v1304 = vmul.f32 %v1300, %v1236
        %v1305 = vmul.f32 %v1301, %v1237
        %v1306 = vmul.f32 %v1302, %v1238
        %v1307 = vmul.f32 %v1303, %v1239
        %v1308 = vmul.f32 %v1304, 1.442695
        %v1309 = vpow.pop %v1308
        %v1310 = vmul.f32 %v1305, 1.442695
        %v1311 = vpow.pop %v1310
        %v1312 = vmul.f32 %v1306, 1.442695
        %v1313 = vpow.pop %v1312
        %v1314 = vmul.f32 %v1307, 1.442695
        %v1315 = vpow.pop %v1314
        %v1316 = vmul.f32 %v1296, %v1309
        %v1317 = vmul.f32 %v1297, %v1311
        %v1318 = vmul.f32 %v1298, %v1313
        %v1319 = vmul.f32 %v1299, %v1315
        %v1320 = vsub.f32 1.0, %v1316
        %v1321 = vsub.f32 1.0, %v1317
        %v1322 = vsub.f32 1.0, %v1318
        %v1323 = vsub.f32 1.0, %v1319
        %v1324 = vmul.f32 %v1232, %v1320
        %v1325 = vmul.f32 %v1233, %v1321
        %v1326 = vmul.f32 %v1234, %v1322
        %v1327 = vmul.f32 %v1235, %v1323
        %v1328 = vadd.f32 %v1324, 1.0
        %v1329 = vadd.f32 %v1325, 1.0
        %v1330 = vadd.f32 %v1326, 1.0
        %v1331 = vadd.f32 %v1327, 1.0
        %v1332 = vmul.f32 %v1220, %v1328
        %v1333 = vmul.f32 %v1221, %v1329
        %v1334 = vmul.f32 %v1222, %v1330
        %v1335 = vmul.f32 %v1223, %v1331
        %v1336 = vld [vmem:[#allocation16] sm:$0xf]
        %v1337 = vld [vmem:[#allocation18] sm:$0xf]
        %vm1338 = vcmask 1040384
        %v1339 = vsel %vm1338, %v1332, 0.0
        %v1340 = vsel %vm1338, %v1333, 0.0
        %v1341 = vadd.f32 %v1339, %v1340
        %v1342 = vsel %vm1338, %v1334, 0.0
        %v1343 = vadd.f32 %v1341, %v1342
        %v1344 = vsel %vm1338, %v1335, 0.0
        %v1345 = vadd.f32 %v1343, %v1344
        %1346 = vadd.xlane.f32.xlu0 %v1345
        %v1347 = vpop.xlane.xlu0 %1346
        %v1348 = vrcp.pop 512.0
        %v1349 = vmul.f32 512.0, %v1348
        %v1350 = vsub.f32 1.0, %v1349
        %v1351 = vmul.f32 %v1348, %v1350
        %v1352 = vadd.f32 %v1348, %v1351
        %vm1353 = vweird.f32 %v1348
        %v1354 = vsel %vm1353, %v1348, %v1352
        %v1355 = vmul.f32 %v1347, %v1354
        %v1356 = vsub.f32 %v1332, %v1355
        %v1357 = vsub.f32 %v1333, %v1355
        %v1358 = vsub.f32 %v1334, %v1355
        %v1359 = vsub.f32 %v1335, %v1355
        %v1360 = vmul.f32 %v1356, %v1356
        %v1361 = vmul.f32 %v1357, %v1357
        %v1362 = vmul.f32 %v1358, %v1358
        %v1363 = vmul.f32 %v1359, %v1359
        %v1364 = vsel %vm1338, %v1360, 0.0
        %v1365 = vsel %vm1338, %v1361, 0.0
        %v1366 = vadd.f32 %v1364, %v1365
        %v1367 = vsel %vm1338, %v1362, 0.0
        %v1368 = vadd.f32 %v1366, %v1367
        %v1369 = vsel %vm1338, %v1363, 0.0
        %v1370 = vadd.f32 %v1368, %v1369
        %1371 = vadd.xlane.f32.xlu0 %v1370
        %v1372 = vpop.xlane.xlu0 %1371
        %v1373 = vmul.f32 %v1372, %v1354
        %v1374 = vadd.f32 %v1373, 1e-05
        %v1375 = vrsqrt.pop %v1374
        %v1376 = vmul.f32 %v1375, %v1374
        %v1377 = vmul.f32 %v1376, %v1375
        %v1378 = vmul.f32 0.5, %v1377
        %v1379 = vsub.f32 1.5, %v1378
        %v1380 = vmul.f32 %v1375, %v1379
        %vm1381 = vweird.f32 %v1374
        %vm1382 = vweird.f32 %v1375
        %vm1383 = vmor %vm1381, %vm1382
        %v1384 = vsel %vm1383, %v1375, %v1380
        %v1385 = vmul.f32 %v1356, %v1384
        %v1386 = vmul.f32 %v1357, %v1384
        %v1387 = vmul.f32 %v1358, %v1384
        %v1388 = vmul.f32 %v1359, %v1384
        %v1390 = vperm.slane %v1336, 0
        %v1391 = vperm.slane %v1336, 1
        %v1392 = vperm.slane %v1336, 2
        %v1393 = vperm.slane %v1336, 3
        %v1398 = vmul.f32 %v1385, %v1390
        %v1399 = vmul.f32 %v1386, %v1391
        %v1400 = vmul.f32 %v1387, %v1392
        %v1401 = vmul.f32 %v1388, %v1393
        %v1403 = vperm.slane %v1337, 0
        %v1404 = vperm.slane %v1337, 1
        %v1405 = vperm.slane %v1337, 2
        %v1406 = vperm.slane %v1337, 3
        %v1411 = vadd.f32 %v1398, %v1403
        %v1412 = vadd.f32 %v1399, %v1404
        %v1413 = vadd.f32 %v1400, %v1405
        %v1414 = vadd.f32 %v1401, %v1406
        %v1415 = vld [vmem:[#allocation19] sm:$0xff]
        %v1416 = vld [vmem:[#allocation19 + $0x8] sm:$0xff]
        %v1417 = vld [vmem:[#allocation19 + $0x10] sm:$0xff]
        %v1418 = vld [vmem:[#allocation19 + $0x18] sm:$0xff]
        %v1419 = vld [vmem:[#allocation19 + $0x20] sm:$0xff]
        %v1420 = vld [vmem:[#allocation19 + $0x28] sm:$0xff]
        %v1421 = vld [vmem:[#allocation19 + $0x30] sm:$0xff]
        %v1422 = vld [vmem:[#allocation19 + $0x38] sm:$0xff]
        %v1423 = vld [vmem:[#allocation19 + $0x40] sm:$0xff]
        %v1424 = vld [vmem:[#allocation19 + $0x48] sm:$0xff]
        %v1425 = vld [vmem:[#allocation19 + $0x50] sm:$0xff]
        %v1426 = vld [vmem:[#allocation19 + $0x58] sm:$0xff]
        %v1427 = vld [vmem:[#allocation19 + $0x60] sm:$0xff]
        %v1428 = vld [vmem:[#allocation19 + $0x68] sm:$0xff]
        %v1429 = vld [vmem:[#allocation19 + $0x70] sm:$0xff]
        %v1430 = vld [vmem:[#allocation19 + $0x78] sm:$0xff]
        %v1431 = vld [vmem:[#allocation19 + $0x80] sm:$0xff]
        %v1432 = vld [vmem:[#allocation19 + $0x88] sm:$0xff]
        %v1433 = vld [vmem:[#allocation19 + $0x90] sm:$0xff]
        %v1434 = vld [vmem:[#allocation19 + $0x98] sm:$0xff]
        %v1435 = vld [vmem:[#allocation19 + $0xa0] sm:$0xff]
        %v1436 = vld [vmem:[#allocation19 + $0xa8] sm:$0xff]
        %v1437 = vld [vmem:[#allocation19 + $0xb0] sm:$0xff]
        %v1438 = vld [vmem:[#allocation19 + $0xb8] sm:$0xff]
        %v1439 = vld [vmem:[#allocation19 + $0xc0] sm:$0xff]
        %v1440 = vld [vmem:[#allocation19 + $0xc8] sm:$0xff]
        %v1441 = vld [vmem:[#allocation19 + $0xd0] sm:$0xff]
        %v1442 = vld [vmem:[#allocation19 + $0xd8] sm:$0xff]
        %v1443 = vld [vmem:[#allocation19 + $0xe0] sm:$0xff]
        %v1444 = vld [vmem:[#allocation19 + $0xe8] sm:$0xff]
        %v1445 = vld [vmem:[#allocation19 + $0xf0] sm:$0xff]
        %v1446 = vld [vmem:[#allocation19 + $0xf8] sm:$0xff]
        %v1447 = vld [vmem:[#allocation19 + $0x100] sm:$0xff]
        %v1448 = vld [vmem:[#allocation19 + $0x108] sm:$0xff]
        %v1449 = vld [vmem:[#allocation19 + $0x110] sm:$0xff]
        %v1450 = vld [vmem:[#allocation19 + $0x118] sm:$0xff]
        %v1451 = vld [vmem:[#allocation19 + $0x120] sm:$0xff]
        %v1452 = vld [vmem:[#allocation19 + $0x128] sm:$0xff]
        %v1453 = vld [vmem:[#allocation19 + $0x130] sm:$0xff]
        %v1454 = vld [vmem:[#allocation19 + $0x138] sm:$0xff]
        %v1455 = vld [vmem:[#allocation19 + $0x140] sm:$0xff]
        %v1456 = vld [vmem:[#allocation19 + $0x148] sm:$0xff]
        %v1457 = vld [vmem:[#allocation19 + $0x150] sm:$0xff]
        %v1458 = vld [vmem:[#allocation19 + $0x158] sm:$0xff]
        %v1459 = vld [vmem:[#allocation19 + $0x160] sm:$0xff]
        %v1460 = vld [vmem:[#allocation19 + $0x168] sm:$0xff]
        %v1461 = vld [vmem:[#allocation19 + $0x170] sm:$0xff]
        %v1462 = vld [vmem:[#allocation19 + $0x178] sm:$0xff]
        %v1463 = vld [vmem:[#allocation19 + $0x180] sm:$0xff]
        %v1464 = vld [vmem:[#allocation19 + $0x188] sm:$0xff]
        %v1465 = vld [vmem:[#allocation19 + $0x190] sm:$0xff]
        %v1466 = vld [vmem:[#allocation19 + $0x198] sm:$0xff]
        %v1467 = vld [vmem:[#allocation19 + $0x1a0] sm:$0xff]
        %v1468 = vld [vmem:[#allocation19 + $0x1a8] sm:$0xff]
        %v1469 = vld [vmem:[#allocation19 + $0x1b0] sm:$0xff]
        %v1470 = vld [vmem:[#allocation19 + $0x1b8] sm:$0xff]
        %v1471 = vld [vmem:[#allocation19 + $0x1c0] sm:$0xff]
        %v1472 = vld [vmem:[#allocation19 + $0x1c8] sm:$0xff]
        %v1473 = vld [vmem:[#allocation19 + $0x1d0] sm:$0xff]
        %v1474 = vld [vmem:[#allocation19 + $0x1d8] sm:$0xff]
        %v1475 = vld [vmem:[#allocation19 + $0x1e0] sm:$0xff]
        %v1476 = vld [vmem:[#allocation19 + $0x1e8] sm:$0xff]
        %v1477 = vld [vmem:[#allocation19 + $0x1f0] sm:$0xff]
        %v1478 = vld [vmem:[#allocation19 + $0x1f8] sm:$0xff]
        %v1479 = vld [vmem:[%s12] sm:$0x1]
        %1480 = vmatpush.msra.mxu0 %v1430
        %1481 = vmatpush.msra.mxu0 %v1429
        %1482 = vmatpush.msra.mxu0 %v1428
        %1483 = vmatpush.msra.mxu0 %v1427
        %1484 = vmatpush.msra.mxu0 %v1426
        %1485 = vmatpush.msra.mxu0 %v1425
        %1486 = vmatpush.msra.mxu0 %v1424
        %1487 = vmatpush.msra.mxu0 %v1423
        %1488 = vmatpush.msra.mxu0 %v1422
        %1489 = vmatpush.msra.mxu0 %v1421
        %1490 = vmatpush.msra.mxu0 %v1420
        %1491 = vmatpush.msra.mxu0 %v1419
        %1492 = vmatpush.msra.mxu0 %v1418
        %1493 = vmatpush.msra.mxu0 %v1417
        %1494 = vmatpush.msra.mxu0 %v1416
        %1495 = vmatpush.msra.mxu0 %v1415
        %1496 = vmatmul.f32.gmra.mxu0 %v1411
        %v1497 = vpop.f32.mrf.mxu0
        %v1498 = vadd.f32 %v1479, %v1497
        %1499 = vdwg.mxu0
        %1500 = vmatpush.msra.mxu0 %v1446
        %1501 = vmatpush.msra.mxu0 %v1445
        %1502 = vmatpush.msra.mxu0 %v1444
        %1503 = vmatpush.msra.mxu0 %v1443
        %1504 = vmatpush.msra.mxu0 %v1442
        %1505 = vmatpush.msra.mxu0 %v1441
        %1506 = vmatpush.msra.mxu0 %v1440
        %1507 = vmatpush.msra.mxu0 %v1439
        %1508 = vmatpush.msra.mxu0 %v1438
        %1509 = vmatpush.msra.mxu0 %v1437
        %1510 = vmatpush.msra.mxu0 %v1436
        %1511 = vmatpush.msra.mxu0 %v1435
        %1512 = vmatpush.msra.mxu0 %v1434
        %1513 = vmatpush.msra.mxu0 %v1433
        %1514 = vmatpush.msra.mxu0 %v1432
        %1515 = vmatpush.msra.mxu0 %v1431
        %1516 = vmatmul.f32.gmra.mxu0 %v1412
        %v1517 = vpop.f32.mrf.mxu0
        %v1518 = vadd.f32 %v1498, %v1517
        %1519 = vdwg.mxu0
        %1520 = vmatpush.msra.mxu0 %v1462
        %1521 = vmatpush.msra.mxu0 %v1461
        %1522 = vmatpush.msra.mxu0 %v1460
        %1523 = vmatpush.msra.mxu0 %v1459
        %1524 = vmatpush.msra.mxu0 %v1458
        %1525 = vmatpush.msra.mxu0 %v1457
        %1526 = vmatpush.msra.mxu0 %v1456
        %1527 = vmatpush.msra.mxu0 %v1455
        %1528 = vmatpush.msra.mxu0 %v1454
        %1529 = vmatpush.msra.mxu0 %v1453
        %1530 = vmatpush.msra.mxu0 %v1452
        %1531 = vmatpush.msra.mxu0 %v1451
        %1532 = vmatpush.msra.mxu0 %v1450
        %1533 = vmatpush.msra.mxu0 %v1449
        %1534 = vmatpush.msra.mxu0 %v1448
        %1535 = vmatpush.msra.mxu0 %v1447
        %1536 = vmatmul.f32.gmra.mxu0 %v1413
        %v1537 = vpop.f32.mrf.mxu0
        %v1538 = vadd.f32 %v1518, %v1537
        %1539 = vdwg.mxu0
        %1540 = vmatpush.msra.mxu0 %v1478
        %1541 = vmatpush.msra.mxu0 %v1477
        %1542 = vmatpush.msra.mxu0 %v1476
        %1543 = vmatpush.msra.mxu0 %v1475
        %1544 = vmatpush.msra.mxu0 %v1474
        %1545 = vmatpush.msra.mxu0 %v1473
        %1546 = vmatpush.msra.mxu0 %v1472
        %1547 = vmatpush.msra.mxu0 %v1471
        %1548 = vmatpush.msra.mxu0 %v1470
        %1549 = vmatpush.msra.mxu0 %v1469
        %1550 = vmatpush.msra.mxu0 %v1468
        %1551 = vmatpush.msra.mxu0 %v1467
        %1552 = vmatpush.msra.mxu0 %v1466
        %1553 = vmatpush.msra.mxu0 %v1465
        %1554 = vmatpush.msra.mxu0 %v1464
        %1555 = vmatpush.msra.mxu0 %v1463
        %1556 = vmatmul.f32.gmra.mxu0 %v1414
        %v1557 = vpop.f32.mrf.mxu0
        %v1558 = vadd.f32 %v1538, %v1557
        %1559 = vdwg.mxu0
        %v1560 = vld [vmem:[%s13] sm:$0x1]
        %v1561 = vld [vmem:[%s14] sm:$0x1]
        %v1562 = vsel %vm1338, %v1558, 0.0
        %1563 = vadd.xlane.f32.xlu0 %v1562
        %v1564 = vpop.xlane.xlu0 %1563
        %v1565 = vrcp.pop 128.0
        %v1566 = vmul.f32 128.0, %v1565
        %v1567 = vsub.f32 1.0, %v1566
        %v1568 = vmul.f32 %v1565, %v1567
        %v1569 = vadd.f32 %v1565, %v1568
        %vm1570 = vweird.f32 %v1565
        %v1571 = vsel %vm1570, %v1565, %v1569
        %v1572 = vmul.f32 %v1564, %v1571
        %v1573 = vsub.f32 %v1558, %v1572
        %v1574 = vmul.f32 %v1573, %v1573
        %v1575 = vsel %vm1338, %v1574, 0.0
        %1576 = vadd.xlane.f32.xlu0 %v1575
        %v1577 = vpop.xlane.xlu0 %1576
        %v1578 = vmul.f32 %v1577, %v1571
        %v1579 = vadd.f32 %v1578, 1e-05
        %v1580 = vrsqrt.pop %v1579
        %v1581 = vmul.f32 %v1580, %v1579
        %v1582 = vmul.f32 %v1581, %v1580
        %v1583 = vmul.f32 0.5, %v1582
        %v1584 = vsub.f32 1.5, %v1583
        %v1585 = vmul.f32 %v1580, %v1584
        %vm1586 = vweird.f32 %v1579
        %vm1587 = vweird.f32 %v1580
        %vm1588 = vmor %vm1586, %vm1587
        %v1589 = vsel %vm1588, %v1580, %v1585
        %v1590 = vmul.f32 %v1573, %v1589
        %v1591 = vmul.f32 %v1590, %v1560
        %v1592 = vadd.f32 %v1591, %v1561
        %v1593 = vmul.f32 %v912, %v1592
        %v1594 = vadd.f32 %v917, %v1593
        %1595 = vst [vmem:[%s696] sm:$0x1] %v1594
        %1596 = vst [vmem:[#allocation22] sm:$0x1] %v720
        %1597 = vst [vmem:[#allocation24] sm:$0x1] %v724
        %s1598 = sand.u32 %s368, 1
        %s1599 = scalar_lea.sflag [#allocation4], %s1598
        %s1600 = sand.u32 %s368, 1
        %s1601 = scalar_lea.vmem [#allocation21], %s1600
        // Predicated region
        $region129: #{memory_forward.1} parent=79 // pred_check
          %p1602 = pneg %p378
        $region130: #{memory_forward.1} parent=79 // pred_check_branch
          %1604 = sbr.rel (%p1602) target = $region132
        $region131: #{memory_forward.1} parent=79 // pred_region
          %1606 = vsyncadd %s1599, 0
          %s1607 = scalar_lea.hbm %s15, %s40
          %s1609 = sshll.u32 %s1601, 4
          %s1610 = int_to_ptr.vmem [resolvable:$true] %s1609
          %s1611 = sshll.u32 %s1607, 4
          %s1612 = int_to_ptr.hbm [resolvable:$true] %s1611
          %1614 = dma.vmem_to_hbm [thread:$0]  %s1610, 16, %s1612, %s1599
        $region132: #{memory_forward.1} parent=79 // pred_fallthru
          _
        // Predicated region
        $region133: #{memory_forward.1} parent=79 // pred_check
          %p1615 = pneg %p399
        $region134: #{memory_forward.1} parent=79 // pred_check_branch
          %1617 = sbr.rel (%p1615) target = $region136
        $region135: #{memory_forward.1} parent=79 // pred_region
          %1619 = vsyncadd [#allocation23], 0
          %s1621 = sshll.u32 [#allocation22], 4
          %s1622 = int_to_ptr.vmem [resolvable:$true] %s1621
          %s1623 = sshll.u32 %s16, 4
          %s1624 = int_to_ptr.hbm [resolvable:$true] %s1623
          %1626 = dma.vmem_to_hbm [thread:$0]  %s1622, 16, %s1624, [#allocation23]
        $region136: #{memory_forward.1} parent=79 // pred_fallthru
          _
        // Predicated region
        $region137: #{memory_forward.1} parent=79 // pred_check
          %p1627 = pneg %p420
        $region138: #{memory_forward.1} parent=79 // pred_check_branch
          %1629 = sbr.rel (%p1627) target = $region140
        $region139: #{memory_forward.1} parent=79 // pred_region
          %1631 = vsyncadd [#allocation23], 0
          %s1633 = sshll.u32 [#allocation24], 4
          %s1634 = int_to_ptr.vmem [resolvable:$true] %s1633
          %s1635 = sshll.u32 %s17, 4
          %s1636 = int_to_ptr.hbm [resolvable:$true] %s1635
          %1638 = dma.vmem_to_hbm [thread:$0]  %s1634, 16, %s1636, [#allocation23]
        $region140: #{memory_forward.1} parent=79 // pred_fallthru
          _
        // Predicated region
        $region141: #{memory_forward.1} parent=79 // pred_check
          %p1639 = pneg %p399
        $region142: #{memory_forward.1} parent=79 // pred_check_branch
          %1641 = sbr.rel (%p1639) target = $region144
        $region143: #{memory_forward.1} parent=79 // pred_region
          %1643 = dma.done [#allocation23], 16
        $region144: #{memory_forward.1} parent=79 // pred_fallthru
          _
        // Predicated region
        $region145: #{memory_forward.1} parent=79 // pred_check
          %p1644 = pneg %p420
        $region146: #{memory_forward.1} parent=79 // pred_check_branch
          %1646 = sbr.rel (%p1644) target = $region148
        $region147: #{memory_forward.1} parent=79 // pred_region
          %1648 = dma.done [#allocation23], 16
        $region148: #{memory_forward.1} parent=79 // pred_fallthru
          _
      $region80: #{memory_forward.1} parent=5 // pred_fallthru
        _
      %p1649 = scmp.le.s32.totalorder 2, %s35
      // Predicated region
      $region149: #{memory_forward.1} parent=5 // pred_check
        %p1650 = pneg %p1649
      $region150: #{memory_forward.1} parent=5 // pred_check_branch
        %1652 = sbr.rel (%p1650) target = $region152
      $region151: #{memory_forward.1} parent=5 // pred_region
        %s1653 = ssub.s32 %s35, 2
        // Predicated region
        $region153: #{memory_forward.1} parent=151 // pred_check
          %p1654 = pneg %p384
        $region154: #{memory_forward.1} parent=151 // pred_check_branch
          %1656 = sbr.rel (%p1654) target = $region156
        $region155: #{memory_forward.1} parent=151 // pred_region
          %s1657 = sand.u32 %s369, 1
          %s1658 = scalar_lea.sflag [#allocation4], %s1657
          %s1659 = sand.u32 %s369, 1
          %s1660 = scalar_lea.vmem [#allocation21], %s1659
          %1662 = dma.done %s1658, 16
        $region156: #{memory_forward.1} parent=151 // pred_fallthru
          _
      $region152: #{memory_forward.1} parent=5 // pred_fallthru
        _
    $region6: #{memory_forward.1} parent=1 // loop_footer
      %s39 = sadd.s32 1, %s35
    $region7: #{memory_forward.1} parent=1 // loop_footer_branch
      %34 = sbr.rel target = $region3
    $region8: #{memory_forward.1} parent=1 // loop_exit
      _
    %1663 = vsyncpa [#allocation3], 1
    %s1664 = scalar_lea.sflag [#allocation3], 1
    %1665 = vsyncpa %s1664, 1
    %1666 = vsyncpa [#allocation8], 1
    %1667 = vsyncpa [#allocation11], 1
    %1668 = vsyncpa [#allocation14], 1
    %1669 = vsyncpa [#allocation17], 1
    %1670 = vsyncpa [#allocation20], 1
    %1671 = vsyncpa [#allocation4], 1
    %s1672 = scalar_lea.sflag [#allocation4], 1
    %1673 = vsyncpa %s1672, 1
    %1674 = vsyncpa [#allocation23], 1
    %1675 = vsyncpa [#allocation5], 1
    %s1676 = scalar_lea.sflag [#allocation5], 1
    %1677 = vsyncpa %s1676, 1

</llo_original>
